<compile_context>
chip_gen: v7x
topology: tpu7x:2x2x1
jax: 0.10.0
libtpu: 0.0.40
codegen_flags: <defaults>
</compile_context>

<pallas_src>
import functools

import jax
import jax.numpy as jnp
from jax.experimental import pallas as pl
from jax.experimental.pallas import tpu as pltpu


def _align(n, a):
    return ((n + a - 1) // a) * a


def _dense_conv_kernel(x_ref, w_ref, b_ref, o_ref, slab_ref, *,
                       num_layer, K, L, p, B, c_in0, c_out,
                       slot_in, slot_out, Lp, n_rows):
    # x_ref   : (B, L, c_in0)                       raw input (no host pad)
    # w_ref   : (num_layer*K, C_total, c_out_pad)   per-(layer, tap) weights in
    #           slab channel order; zero rows for unused channels, zero cols
    #           beyond the real c_out.
    # b_ref   : (num_layer, 1, c_out_pad)
    # o_ref   : (B*L, c_out_pad)                    lane-dense output
    # slab_ref: (B*Lp, C_total) f32 scratch         dense feature slab
    #
    # Slab rows (per batch): [p zero halo | L valid rows | p zero halo]
    # Slab channels:         [input slot | layer0 out | layer1 out | ...]
    f32 = jnp.float32
    c_out_pad = w_ref.shape[-1]

    # Zero the slab once: this creates every layer's "same" zero padding
    # (halo rows) and the not-yet-produced channel slots for free.
    slab_ref[...] = jnp.zeros(slab_ref.shape, f32)
    for b in range(B):                                     # static batch loop
        r0 = b * Lp + p
        slab_ref[r0:r0 + L, 0:c_in0] = x_ref[b].astype(f32)

    for idx in range(num_layer):                           # static layer loop
        # K accumulating MXU matmuls against sublane-shifted views of ONE
        # slab.  No lane concatenation: the contraction spans all slab
        # channels and zero weight rows kill the channels this layer does
        # not (yet) consume.
        acc = jnp.zeros((n_rows, c_out_pad), f32)
        for k in range(K):                                 # static tap loop
            acc += jnp.dot(slab_ref[k:k + n_rows, :], w_ref[idx * K + k],
                           preferred_element_type=f32)

        bias = b_ref[idx]                                  # (1, c_out_pad)
        last = idx == num_layer - 1
        for b in range(B):                                 # static batch loop
            # Valid rows of batch b live at acc rows [b*Lp, b*Lp + L);
            # bias + ELU only on those rows (no wasted EUP work on halos).
            y = acc[b * Lp:b * Lp + L, :] + bias
            y = jnp.where(y > 0.0, y, jnp.exp(jnp.minimum(y, 0.0)) - 1.0)
            if last:
                # Full-lane (c_out padded to a multiple of 128) unmasked
                # store; the wrapper slices the real channels back out.
                o_ref[b * L:(b + 1) * L, :] = y.astype(o_ref.dtype)
            else:
                r0 = b * Lp + p
                c0 = slot_in + idx * slot_out
                slab_ref[r0:r0 + L, c0:c0 + c_out] = y[:, :c_out]


def dense_same_shape_conv1d(params, inputs):
    """Fused forward pass.  inputs: (B, L, in_channels) -> (B, L, out_channels)."""
    B, L, c_in0 = inputs.shape
    num_layer = len(params)
    K, _, c_out = params[0][0].shape
    assert K % 2 == 1, "DenseSameShapeConv1d same-shape output requires odd kernel_size"
    p = K // 2

    Lp = L + 2 * p                 # per-batch slab rows (p halo per side)
    R = B * Lp                     # slab rows (batch folded into matmul rows)
    n_rows = R - 2 * p             # rows whose conv windows are fully in-bounds

    slot_in = _align(c_in0, 8)     # 8-aligned channel slots inside the slab
    slot_out = _align(c_out, 8)
    C_total = slot_in + num_layer * slot_out
    c_out_pad = _align(c_out, 128)   # lane-dense matmul / store width

    # Host-side weight re-layout: (K, c_in_idx, c_out) -> (K, C_total, c_out_pad)
    # with rows at their slab channel offsets (torch's concat order
    # [input, out_0, out_1, ...] matches the slab layout) and zeros elsewhere.
    w_dtype = jnp.float32          # TODO(synk): bf16 storage + f32 accum on v6e/v7x
    w_all, b_all = [], []
    for idx, (w, b) in enumerate(params):
        assert w.shape == (K, c_in0 + idx * c_out, c_out)
        wf = jnp.zeros((K, C_total, c_out_pad), w_dtype)
        wf = wf.at[:, 0:c_in0, 0:c_out].set(w[:, 0:c_in0, :].astype(w_dtype))
        for j in range(idx):
            src = w[:, c_in0 + j * c_out:c_in0 + (j + 1) * c_out, :]
            off = slot_in + j * slot_out
            wf = wf.at[:, off:off + c_out, 0:c_out].set(src.astype(w_dtype))
        w_all.append(wf)
        bf = jnp.zeros((1, c_out_pad), w_dtype).at[0, 0:c_out].set(b.astype(w_dtype))
        b_all.append(bf)
    w_all = jnp.concatenate(w_all, axis=0)      # (num_layer*K, C_total, c_out_pad)
    b_all = jnp.stack(b_all, axis=0)            # (num_layer, 1, c_out_pad)

    # Honest cost estimate: actually-executed work, actual dtypes.
    flops = 2 * num_layer * K * n_rows * C_total * c_out_pad
    trans = num_layer * B * L * c_out_pad
    bytes_accessed = (inputs.size * inputs.dtype.itemsize
                      + w_all.size * w_all.dtype.itemsize
                      + b_all.size * b_all.dtype.itemsize
                      + B * L * c_out_pad * inputs.dtype.itemsize)

    kernel = functools.partial(
        _dense_conv_kernel, num_layer=num_layer, K=K, L=L, p=p, B=B,
        c_in0=c_in0, c_out=c_out, slot_in=slot_in, slot_out=slot_out,
        Lp=Lp, n_rows=n_rows)

    out = pl.pallas_call(
        kernel,
        out_shape=jax.ShapeDtypeStruct((B * L, c_out_pad), inputs.dtype),
        grid=(1,),
        in_specs=[
            pl.BlockSpec((B, L, c_in0), lambda i: (0, 0, 0)),
            pl.BlockSpec((num_layer * K, C_total, c_out_pad), lambda i: (0, 0, 0)),
            pl.BlockSpec((num_layer, 1, c_out_pad), lambda i: (0, 0, 0)),
        ],
        out_specs=pl.BlockSpec((B * L, c_out_pad), lambda i: (0, 0)),
        scratch_shapes=[pltpu.VMEM((R, C_total), jnp.float32)],
        compiler_params=pltpu.CompilerParams(dimension_semantics=("arbitrary",)),
        cost_estimate=pl.CostEstimate(flops=int(flops),
                                      transcendentals=int(trans),
                                      bytes_accessed=int(bytes_accessed)),
    )(inputs, w_all, b_all)

    # Layout plumbing only: un-pad the lane-dense store.
    return out.reshape(B, L, c_out_pad)[:, :, :c_out]


def init_params(key, num_layer, in_channels, out_channels, kernel_size):
    """Deterministic param init matching the shapes of the torch module."""
    params = []
    for idx in range(num_layer):
        c_in = in_channels if idx == 0 else in_channels + idx * out_channels
        key, kw, kb = jax.random.split(key, 3)
        bound = 1.0 / jnp.sqrt(jnp.float32(c_in * kernel_size))
        w = jax.random.uniform(kw, (kernel_size, c_in, out_channels),
                               jnp.float32, -bound, bound)
        b = jax.random.uniform(kb, (out_channels,), jnp.float32, -bound, bound)
        params.append((w, b))
    return params


def _reference(params, inputs):
    """Pure-JAX reference (no Pallas) for a correctness sanity check."""
    this_input = inputs
    output = None
    for idx, (w, b) in enumerate(params):
        if idx > 0:
            this_input = jnp.concatenate([this_input, output], axis=-1)
        K = w.shape[0]
        p = K // 2
        y = jax.lax.conv_general_dilated(
            this_input, w, window_strides=(1,), padding=[(p, p)],
            dimension_numbers=("NWC", "WIO", "NWC"))
        y = y + b
        output = jnp.where(y > 0.0, y, jnp.exp(jnp.minimum(y, 0.0)) - 1.0)
    return output


if __name__ == "__main__":
    num_layer = 3
    in_channels = 4
    out_channels = 8
    kernel_size = 3
    B, L = 2, 16

    key = jax.random.PRNGKey(0)
    key, kx = jax.random.split(key)
    x = jax.random.normal(kx, (B, L, in_channels), jnp.float32)

    params = init_params(key, num_layer, in_channels, out_channels, kernel_size)

    out = dense_same_shape_conv1d(params, x)
    out = jax.block_until_ready(out)

    ref = _reference(params, x)
    assert out.shape == (B, L, out_channels)
    assert jnp.allclose(out, ref, atol=2e-5, rtol=2e-5)

    print("KERNEL_OK")
</pallas_src>

<mosaic_0001>
module attributes {stable_mosaic.version = 11 : i64} {
  func.func @_dense_conv_kernel(%arg0: i32, %arg1: memref<2x16x4xf32, #tpu.memory_space<vmem>>, %arg2: memref<9x32x128xf32, #tpu.memory_space<vmem>>, %arg3: memref<3x1x128xf32, #tpu.memory_space<vmem>>, %arg4: memref<32x128xf32, #tpu.memory_space<vmem>>, %arg5: memref<36x32xf32, #tpu.memory_space<vmem>>) attributes {dimension_semantics = [#tpu.dimension_semantics<arbitrary>], iteration_bounds = array<i64: 1>, scalar_prefetch = 0 : i64, scratch_operands = 1 : i64, tpu.core_type = #tpu.core_type<tc>, window_params = [{pipeline_mode = #tpu.pipeline_mode<synchronous>, transform_indices = @transform_0, window_bounds = array<i64: 2, 16, 4>}, {pipeline_mode = #tpu.pipeline_mode<synchronous>, transform_indices = @transform_1, window_bounds = array<i64: 9, 32, 128>}, {pipeline_mode = #tpu.pipeline_mode<synchronous>, transform_indices = @transform_2, window_bounds = array<i64: 3, 1, 128>}, {pipeline_mode = #tpu.pipeline_mode<synchronous>, transform_indices = @transform_3, window_bounds = array<i64: 32, 128>}]} {
    %cst = arith.constant 0.000000e+00 : f32
    %0 = vector.broadcast %cst : f32 to vector<36x32xf32>
    %c0 = arith.constant 0 : index
    %c0_0 = arith.constant 0 : index
    %1 = vector.load %arg5[%c0, %c0_0] : memref<36x32xf32, #tpu.memory_space<vmem>>, vector<36x32xf32>
    tpu.vector_store %arg5[%c0, %c0_0], %0 {strides = array<i32>} : memref<36x32xf32, #tpu.memory_space<vmem>>, vector<36x32xf32>,
    %c0_1 = arith.constant 0 : index
    %c0_2 = arith.constant 0 : index
    %c0_3 = arith.constant 0 : index
    %2 = vector.load %arg1[%c0_1, %c0_2, %c0_3] : memref<2x16x4xf32, #tpu.memory_space<vmem>>, vector<1x16x4xf32>
    %3 = vector.shape_cast %2 : vector<1x16x4xf32> to vector<16x4xf32>
    %c1 = arith.constant 1 : index
    %c0_4 = arith.constant 0 : index
    %4 = vector.load %arg5[%c1, %c0_4] : memref<36x32xf32, #tpu.memory_space<vmem>>, vector<16x4xf32>
    tpu.vector_store %arg5[%c1, %c0_4], %3 {strides = array<i32>} : memref<36x32xf32, #tpu.memory_space<vmem>>, vector<16x4xf32>,
    %c1_5 = arith.constant 1 : index
    %c0_6 = arith.constant 0 : index
    %c0_7 = arith.constant 0 : index
    %5 = vector.load %arg1[%c1_5, %c0_6, %c0_7] : memref<2x16x4xf32, #tpu.memory_space<vmem>>, vector<1x16x4xf32>
    %6 = vector.shape_cast %5 : vector<1x16x4xf32> to vector<16x4xf32>
    %c19 = arith.constant 19 : index
    %c0_8 = arith.constant 0 : index
    %7 = vector.load %arg5[%c19, %c0_8] : memref<36x32xf32, #tpu.memory_space<vmem>>, vector<16x4xf32>
    tpu.vector_store %arg5[%c19, %c0_8], %6 {strides = array<i32>} : memref<36x32xf32, #tpu.memory_space<vmem>>, vector<16x4xf32>,
    %cst_9 = arith.constant 0.000000e+00 : f32
    %8 = vector.broadcast %cst_9 : f32 to vector<34x128xf32>
    %c0_10 = arith.constant 0 : index
    %c0_11 = arith.constant 0 : index
    %9 = vector.load %arg5[%c0_10, %c0_11] : memref<36x32xf32, #tpu.memory_space<vmem>>, vector<34x32xf32>
    %c0_12 = arith.constant 0 : index
    %c0_13 = arith.constant 0 : index
    %c0_14 = arith.constant 0 : index
    %10 = vector.load %arg2[%c0_12, %c0_13, %c0_14] : memref<9x32x128xf32, #tpu.memory_space<vmem>>, vector<1x32x128xf32>
    %11 = vector.shape_cast %10 : vector<1x32x128xf32> to vector<32x128xf32>
    %cst_15 = arith.constant dense<0.000000e+00> : vector<34x128xf32>
    %12 = tpu.matmul %9, %11, %cst_15 {dimension_numbers = #tpu.dot_dimension_numbers<[1], [0], [0], [1], [0, 0, 1, 1], [], []>} : vector<34x32xf32>, vector<32x128xf32>, vector<34x128xf32> -> vector<34x128xf32>
    %13 = arith.addf %8, %12 : vector<34x128xf32>
    %c1_16 = arith.constant 1 : index
    %c0_17 = arith.constant 0 : index
    %14 = vector.load %arg5[%c1_16, %c0_17] : memref<36x32xf32, #tpu.memory_space<vmem>>, vector<34x32xf32>
    %c1_18 = arith.constant 1 : index
    %c0_19 = arith.constant 0 : index
    %c0_20 = arith.constant 0 : index
    %15 = vector.load %arg2[%c1_18, %c0_19, %c0_20] : memref<9x32x128xf32, #tpu.memory_space<vmem>>, vector<1x32x128xf32>
    %16 = vector.shape_cast %15 : vector<1x32x128xf32> to vector<32x128xf32>
    %cst_21 = arith.constant dense<0.000000e+00> : vector<34x128xf32>
    %17 = tpu.matmul %14, %16, %cst_21 {dimension_numbers = #tpu.dot_dimension_numbers<[1], [0], [0], [1], [0, 0, 1, 1], [], []>} : vector<34x32xf32>, vector<32x128xf32>, vector<34x128xf32> -> vector<34x128xf32>
    %18 = arith.addf %13, %17 : vector<34x128xf32>
    %c2 = arith.constant 2 : index
    %c0_22 = arith.constant 0 : index
    %19 = vector.load %arg5[%c2, %c0_22] : memref<36x32xf32, #tpu.memory_space<vmem>>, vector<34x32xf32>
    %c2_23 = arith.constant 2 : index
    %c0_24 = arith.constant 0 : index
    %c0_25 = arith.constant 0 : index
    %20 = vector.load %arg2[%c2_23, %c0_24, %c0_25] : memref<9x32x128xf32, #tpu.memory_space<vmem>>, vector<1x32x128xf32>
    %21 = vector.shape_cast %20 : vector<1x32x128xf32> to vector<32x128xf32>
    %cst_26 = arith.constant dense<0.000000e+00> : vector<34x128xf32>
    %22 = tpu.matmul %19, %21, %cst_26 {dimension_numbers = #tpu.dot_dimension_numbers<[1], [0], [0], [1], [0, 0, 1, 1], [], []>} : vector<34x32xf32>, vector<32x128xf32>, vector<34x128xf32> -> vector<34x128xf32>
    %23 = arith.addf %18, %22 : vector<34x128xf32>
    %c0_27 = arith.constant 0 : index
    %c0_28 = arith.constant 0 : index
    %c0_29 = arith.constant 0 : index
    %24 = vector.load %arg3[%c0_27, %c0_28, %c0_29] : memref<3x1x128xf32, #tpu.memory_space<vmem>>, vector<1x1x128xf32>
    %25 = vector.shape_cast %24 : vector<1x1x128xf32> to vector<1x128xf32>
    %26 = vector.extract_strided_slice %23 {offsets = [0, 0], sizes = [16, 128], strides = [1, 1]} : vector<34x128xf32> to vector<16x128xf32>
    %27 = vector.broadcast %25 : vector<1x128xf32> to vector<16x128xf32>
    %28 = arith.addf %26, %27 : vector<16x128xf32>
    %cst_30 = arith.constant 0.000000e+00 : f32
    %29 = vector.broadcast %cst_30 : f32 to vector<16x128xf32>
    %30 = arith.cmpf ogt, %28, %29 : vector<16x128xf32>
    %cst_31 = arith.constant 0.000000e+00 : f32
    %31 = vector.broadcast %cst_31 : f32 to vector<16x128xf32>
    %32 = arith.minimumf %28, %31 : vector<16x128xf32>
    %33 = math.exp %32 : vector<16x128xf32>
    %cst_32 = arith.constant 1.000000e+00 : f32
    %34 = vector.broadcast %cst_32 : f32 to vector<16x128xf32>
    %35 = arith.subf %33, %34 : vector<16x128xf32>
    %36 = arith.select %30, %28, %35 : vector<16x128xi1>, vector<16x128xf32>
    %37 = vector.extract_strided_slice %36 {offsets = [0, 0], sizes = [16, 8], strides = [1, 1]} : vector<16x128xf32> to vector<16x8xf32>
    %c1_33 = arith.constant 1 : index
    %c8 = arith.constant 8 : index
    %38 = vector.load %arg5[%c1_33, %c8] : memref<36x32xf32, #tpu.memory_space<vmem>>, vector<16x8xf32>
    tpu.vector_store %arg5[%c1_33, %c8], %37 {strides = array<i32>} : memref<36x32xf32, #tpu.memory_space<vmem>>, vector<16x8xf32>,
    %39 = vector.extract_strided_slice %23 {offsets = [18, 0], sizes = [16, 128], strides = [1, 1]} : vector<34x128xf32> to vector<16x128xf32>
    %40 = vector.broadcast %25 : vector<1x128xf32> to vector<16x128xf32>
    %41 = arith.addf %39, %40 : vector<16x128xf32>
    %cst_34 = arith.constant 0.000000e+00 : f32
    %42 = vector.broadcast %cst_34 : f32 to vector<16x128xf32>
    %43 = arith.cmpf ogt, %41, %42 : vector<16x128xf32>
    %cst_35 = arith.constant 0.000000e+00 : f32
    %44 = vector.broadcast %cst_35 : f32 to vector<16x128xf32>
    %45 = arith.minimumf %41, %44 : vector<16x128xf32>
    %46 = math.exp %45 : vector<16x128xf32>
    %cst_36 = arith.constant 1.000000e+00 : f32
    %47 = vector.broadcast %cst_36 : f32 to vector<16x128xf32>
    %48 = arith.subf %46, %47 : vector<16x128xf32>
    %49 = arith.select %43, %41, %48 : vector<16x128xi1>, vector<16x128xf32>
    %50 = vector.extract_strided_slice %49 {offsets = [0, 0], sizes = [16, 8], strides = [1, 1]} : vector<16x128xf32> to vector<16x8xf32>
    %c19_37 = arith.constant 19 : index
    %c8_38 = arith.constant 8 : index
    %51 = vector.load %arg5[%c19_37, %c8_38] : memref<36x32xf32, #tpu.memory_space<vmem>>, vector<16x8xf32>
    tpu.vector_store %arg5[%c19_37, %c8_38], %50 {strides = array<i32>} : memref<36x32xf32, #tpu.memory_space<vmem>>, vector<16x8xf32>,
    %cst_39 = arith.constant 0.000000e+00 : f32
    %52 = vector.broadcast %cst_39 : f32 to vector<34x128xf32>
    %c0_40 = arith.constant 0 : index
    %c0_41 = arith.constant 0 : index
    %53 = vector.load %arg5[%c0_40, %c0_41] : memref<36x32xf32, #tpu.memory_space<vmem>>, vector<34x32xf32>
    %c3 = arith.constant 3 : index
    %c0_42 = arith.constant 0 : index
    %c0_43 = arith.constant 0 : index
    %54 = vector.load %arg2[%c3, %c0_42, %c0_43] : memref<9x32x128xf32, #tpu.memory_space<vmem>>, vector<1x32x128xf32>
    %55 = vector.shape_cast %54 : vector<1x32x128xf32> to vector<32x128xf32>
    %cst_44 = arith.constant dense<0.000000e+00> : vector<34x128xf32>
    %56 = tpu.matmul %53, %55, %cst_44 {dimension_numbers = #tpu.dot_dimension_numbers<[1], [0], [0], [1], [0, 0, 1, 1], [], []>} : vector<34x32xf32>, vector<32x128xf32>, vector<34x128xf32> -> vector<34x128xf32>
    %57 = arith.addf %52, %56 : vector<34x128xf32>
    %c1_45 = arith.constant 1 : index
    %c0_46 = arith.constant 0 : index
    %58 = vector.load %arg5[%c1_45, %c0_46] : memref<36x32xf32, #tpu.memory_space<vmem>>, vector<34x32xf32>
    %c4 = arith.constant 4 : index
    %c0_47 = arith.constant 0 : index
    %c0_48 = arith.constant 0 : index
    %59 = vector.load %arg2[%c4, %c0_47, %c0_48] : memref<9x32x128xf32, #tpu.memory_space<vmem>>, vector<1x32x128xf32>
    %60 = vector.shape_cast %59 : vector<1x32x128xf32> to vector<32x128xf32>
    %cst_49 = arith.constant dense<0.000000e+00> : vector<34x128xf32>
    %61 = tpu.matmul %58, %60, %cst_49 {dimension_numbers = #tpu.dot_dimension_numbers<[1], [0], [0], [1], [0, 0, 1, 1], [], []>} : vector<34x32xf32>, vector<32x128xf32>, vector<34x128xf32> -> vector<34x128xf32>
    %62 = arith.addf %57, %61 : vector<34x128xf32>
    %c2_50 = arith.constant 2 : index
    %c0_51 = arith.constant 0 : index
    %63 = vector.load %arg5[%c2_50, %c0_51] : memref<36x32xf32, #tpu.memory_space<vmem>>, vector<34x32xf32>
    %c5 = arith.constant 5 : index
    %c0_52 = arith.constant 0 : index
    %c0_53 = arith.constant 0 : index
    %64 = vector.load %arg2[%c5, %c0_52, %c0_53] : memref<9x32x128xf32, #tpu.memory_space<vmem>>, vector<1x32x128xf32>
    %65 = vector.shape_cast %64 : vector<1x32x128xf32> to vector<32x128xf32>
    %cst_54 = arith.constant dense<0.000000e+00> : vector<34x128xf32>
    %66 = tpu.matmul %63, %65, %cst_54 {dimension_numbers = #tpu.dot_dimension_numbers<[1], [0], [0], [1], [0, 0, 1, 1], [], []>} : vector<34x32xf32>, vector<32x128xf32>, vector<34x128xf32> -> vector<34x128xf32>
    %67 = arith.addf %62, %66 : vector<34x128xf32>
    %c1_55 = arith.constant 1 : index
    %c0_56 = arith.constant 0 : index
    %c0_57 = arith.constant 0 : index
    %68 = vector.load %arg3[%c1_55, %c0_56, %c0_57] : memref<3x1x128xf32, #tpu.memory_space<vmem>>, vector<1x1x128xf32>
    %69 = vector.shape_cast %68 : vector<1x1x128xf32> to vector<1x128xf32>
    %70 = vector.extract_strided_slice %67 {offsets = [0, 0], sizes = [16, 128], strides = [1, 1]} : vector<34x128xf32> to vector<16x128xf32>
    %71 = vector.broadcast %69 : vector<1x128xf32> to vector<16x128xf32>
    %72 = arith.addf %70, %71 : vector<16x128xf32>
    %cst_58 = arith.constant 0.000000e+00 : f32
    %73 = vector.broadcast %cst_58 : f32 to vector<16x128xf32>
    %74 = arith.cmpf ogt, %72, %73 : vector<16x128xf32>
    %cst_59 = arith.constant 0.000000e+00 : f32
    %75 = vector.broadcast %cst_59 : f32 to vector<16x128xf32>
    %76 = arith.minimumf %72, %75 : vector<16x128xf32>
    %77 = math.exp %76 : vector<16x128xf32>
    %cst_60 = arith.constant 1.000000e+00 : f32
    %78 = vector.broadcast %cst_60 : f32 to vector<16x128xf32>
    %79 = arith.subf %77, %78 : vector<16x128xf32>
    %80 = arith.select %74, %72, %79 : vector<16x128xi1>, vector<16x128xf32>
    %81 = vector.extract_strided_slice %80 {offsets = [0, 0], sizes = [16, 8], strides = [1, 1]} : vector<16x128xf32> to vector<16x8xf32>
    %c1_61 = arith.constant 1 : index
    %c16 = arith.constant 16 : index
    %82 = vector.load %arg5[%c1_61, %c16] : memref<36x32xf32, #tpu.memory_space<vmem>>, vector<16x8xf32>
    tpu.vector_store %arg5[%c1_61, %c16], %81 {strides = array<i32>} : memref<36x32xf32, #tpu.memory_space<vmem>>, vector<16x8xf32>,
    %83 = vector.extract_strided_slice %67 {offsets = [18, 0], sizes = [16, 128], strides = [1, 1]} : vector<34x128xf32> to vector<16x128xf32>
    %84 = vector.broadcast %69 : vector<1x128xf32> to vector<16x128xf32>
    %85 = arith.addf %83, %84 : vector<16x128xf32>
    %cst_62 = arith.constant 0.000000e+00 : f32
    %86 = vector.broadcast %cst_62 : f32 to vector<16x128xf32>
    %87 = arith.cmpf ogt, %85, %86 : vector<16x128xf32>
    %cst_63 = arith.constant 0.000000e+00 : f32
    %88 = vector.broadcast %cst_63 : f32 to vector<16x128xf32>
    %89 = arith.minimumf %85, %88 : vector<16x128xf32>
    %90 = math.exp %89 : vector<16x128xf32>
    %cst_64 = arith.constant 1.000000e+00 : f32
    %91 = vector.broadcast %cst_64 : f32 to vector<16x128xf32>
    %92 = arith.subf %90, %91 : vector<16x128xf32>
    %93 = arith.select %87, %85, %92 : vector<16x128xi1>, vector<16x128xf32>
    %94 = vector.extract_strided_slice %93 {offsets = [0, 0], sizes = [16, 8], strides = [1, 1]} : vector<16x128xf32> to vector<16x8xf32>
    %c19_65 = arith.constant 19 : index
    %c16_66 = arith.constant 16 : index
    %95 = vector.load %arg5[%c19_65, %c16_66] : memref<36x32xf32, #tpu.memory_space<vmem>>, vector<16x8xf32>
    tpu.vector_store %arg5[%c19_65, %c16_66], %94 {strides = array<i32>} : memref<36x32xf32, #tpu.memory_space<vmem>>, vector<16x8xf32>,
    %cst_67 = arith.constant 0.000000e+00 : f32
    %96 = vector.broadcast %cst_67 : f32 to vector<34x128xf32>
    %c0_68 = arith.constant 0 : index
    %c0_69 = arith.constant 0 : index
    %97 = vector.load %arg5[%c0_68, %c0_69] : memref<36x32xf32, #tpu.memory_space<vmem>>, vector<34x32xf32>
    %c6 = arith.constant 6 : index
    %c0_70 = arith.constant 0 : index
    %c0_71 = arith.constant 0 : index
    %98 = vector.load %arg2[%c6, %c0_70, %c0_71] : memref<9x32x128xf32, #tpu.memory_space<vmem>>, vector<1x32x128xf32>
    %99 = vector.shape_cast %98 : vector<1x32x128xf32> to vector<32x128xf32>
    %cst_72 = arith.constant dense<0.000000e+00> : vector<34x128xf32>
    %100 = tpu.matmul %97, %99, %cst_72 {dimension_numbers = #tpu.dot_dimension_numbers<[1], [0], [0], [1], [0, 0, 1, 1], [], []>} : vector<34x32xf32>, vector<32x128xf32>, vector<34x128xf32> -> vector<34x128xf32>
    %101 = arith.addf %96, %100 : vector<34x128xf32>
    %c1_73 = arith.constant 1 : index
    %c0_74 = arith.constant 0 : index
    %102 = vector.load %arg5[%c1_73, %c0_74] : memref<36x32xf32, #tpu.memory_space<vmem>>, vector<34x32xf32>
    %c7 = arith.constant 7 : index
    %c0_75 = arith.constant 0 : index
    %c0_76 = arith.constant 0 : index
    %103 = vector.load %arg2[%c7, %c0_75, %c0_76] : memref<9x32x128xf32, #tpu.memory_space<vmem>>, vector<1x32x128xf32>
    %104 = vector.shape_cast %103 : vector<1x32x128xf32> to vector<32x128xf32>
    %cst_77 = arith.constant dense<0.000000e+00> : vector<34x128xf32>
    %105 = tpu.matmul %102, %104, %cst_77 {dimension_numbers = #tpu.dot_dimension_numbers<[1], [0], [0], [1], [0, 0, 1, 1], [], []>} : vector<34x32xf32>, vector<32x128xf32>, vector<34x128xf32> -> vector<34x128xf32>
    %106 = arith.addf %101, %105 : vector<34x128xf32>
    %c2_78 = arith.constant 2 : index
    %c0_79 = arith.constant 0 : index
    %107 = vector.load %arg5[%c2_78, %c0_79] : memref<36x32xf32, #tpu.memory_space<vmem>>, vector<34x32xf32>
    %c8_80 = arith.constant 8 : index
    %c0_81 = arith.constant 0 : index
    %c0_82 = arith.constant 0 : index
    %108 = vector.load %arg2[%c8_80, %c0_81, %c0_82] : memref<9x32x128xf32, #tpu.memory_space<vmem>>, vector<1x32x128xf32>
    %109 = vector.shape_cast %108 : vector<1x32x128xf32> to vector<32x128xf32>
    %cst_83 = arith.constant dense<0.000000e+00> : vector<34x128xf32>
    %110 = tpu.matmul %107, %109, %cst_83 {dimension_numbers = #tpu.dot_dimension_numbers<[1], [0], [0], [1], [0, 0, 1, 1], [], []>} : vector<34x32xf32>, vector<32x128xf32>, vector<34x128xf32> -> vector<34x128xf32>
    %111 = arith.addf %106, %110 : vector<34x128xf32>
    %c2_84 = arith.constant 2 : index
    %c0_85 = arith.constant 0 : index
    %c0_86 = arith.constant 0 : index
    %112 = vector.load %arg3[%c2_84, %c0_85, %c0_86] : memref<3x1x128xf32, #tpu.memory_space<vmem>>, vector<1x1x128xf32>
    %113 = vector.shape_cast %112 : vector<1x1x128xf32> to vector<1x128xf32>
    %114 = vector.extract_strided_slice %111 {offsets = [0, 0], sizes = [16, 128], strides = [1, 1]} : vector<34x128xf32> to vector<16x128xf32>
    %115 = vector.broadcast %113 : vector<1x128xf32> to vector<16x128xf32>
    %116 = arith.addf %114, %115 : vector<16x128xf32>
    %cst_87 = arith.constant 0.000000e+00 : f32
    %117 = vector.broadcast %cst_87 : f32 to vector<16x128xf32>
    %118 = arith.cmpf ogt, %116, %117 : vector<16x128xf32>
    %cst_88 = arith.constant 0.000000e+00 : f32
    %119 = vector.broadcast %cst_88 : f32 to vector<16x128xf32>
    %120 = arith.minimumf %116, %119 : vector<16x128xf32>
    %121 = math.exp %120 : vector<16x128xf32>
    %cst_89 = arith.constant 1.000000e+00 : f32
    %122 = vector.broadcast %cst_89 : f32 to vector<16x128xf32>
    %123 = arith.subf %121, %122 : vector<16x128xf32>
    %124 = arith.select %118, %116, %123 : vector<16x128xi1>, vector<16x128xf32>
    %c0_90 = arith.constant 0 : index
    %c0_91 = arith.constant 0 : index
    %125 = vector.load %arg4[%c0_90, %c0_91] : memref<32x128xf32, #tpu.memory_space<vmem>>, vector<16x128xf32>
    tpu.vector_store %arg4[%c0_90, %c0_91], %124 {strides = array<i32>} : memref<32x128xf32, #tpu.memory_space<vmem>>, vector<16x128xf32>,
    %126 = vector.extract_strided_slice %111 {offsets = [18, 0], sizes = [16, 128], strides = [1, 1]} : vector<34x128xf32> to vector<16x128xf32>
    %127 = vector.broadcast %113 : vector<1x128xf32> to vector<16x128xf32>
    %128 = arith.addf %126, %127 : vector<16x128xf32>
    %cst_92 = arith.constant 0.000000e+00 : f32
    %129 = vector.broadcast %cst_92 : f32 to vector<16x128xf32>
    %130 = arith.cmpf ogt, %128, %129 : vector<16x128xf32>
    %cst_93 = arith.constant 0.000000e+00 : f32
    %131 = vector.broadcast %cst_93 : f32 to vector<16x128xf32>
    %132 = arith.minimumf %128, %131 : vector<16x128xf32>
    %133 = math.exp %132 : vector<16x128xf32>
    %cst_94 = arith.constant 1.000000e+00 : f32
    %134 = vector.broadcast %cst_94 : f32 to vector<16x128xf32>
    %135 = arith.subf %133, %134 : vector<16x128xf32>
    %136 = arith.select %130, %128, %135 : vector<16x128xi1>, vector<16x128xf32>
    %c16_95 = arith.constant 16 : index
    %c0_96 = arith.constant 0 : index
    %137 = vector.load %arg4[%c16_95, %c0_96] : memref<32x128xf32, #tpu.memory_space<vmem>>, vector<16x128xf32>
    tpu.vector_store %arg4[%c16_95, %c0_96], %136 {strides = array<i32>} : memref<32x128xf32, #tpu.memory_space<vmem>>, vector<16x128xf32>,
    return
  }
  func.func @transform_0(%arg0: i32) -> (i32, i32, i32) {
    %c0_i32 = arith.constant 0 : i32
    %c0_i32_0 = arith.constant 0 : i32
    %c0_i32_1 = arith.constant 0 : i32
    %c0_i32_2 = arith.constant 0 : i32
    return %c0_i32, %c0_i32_0, %c0_i32_1 : i32, i32, i32
  }
  func.func @transform_1(%arg0: i32) -> (i32, i32, i32) {
    %c0_i32 = arith.constant 0 : i32
    %c0_i32_0 = arith.constant 0 : i32
    %c0_i32_1 = arith.constant 0 : i32
    %c0_i32_2 = arith.constant 0 : i32
    return %c0_i32, %c0_i32_0, %c0_i32_1 : i32, i32, i32
  }
  func.func @transform_2(%arg0: i32) -> (i32, i32, i32) {
    %c0_i32 = arith.constant 0 : i32
    %c0_i32_0 = arith.constant 0 : i32
    %c0_i32_1 = arith.constant 0 : i32
    %c0_i32_2 = arith.constant 0 : i32
    return %c0_i32, %c0_i32_0, %c0_i32_1 : i32, i32, i32
  }
  func.func @transform_3(%arg0: i32) -> (i32, i32) {
    %c0_i32 = arith.constant 0 : i32
    %c0_i32_0 = arith.constant 0 : i32
    %c0_i32_1 = arith.constant 0 : i32
    return %c0_i32, %c0_i32_0 : i32, i32
  }
}

</mosaic_0001>

<llo_original>
// kernel: tpu_custom_call.1
$region0: #{tpu_custom_call.1}
  #allocation0 [shape = 'u32[]', space=smem, size = 0x4, offset = 0x4, fixed_abs, tag = 'smem constant byte address 0x4 - core index']
  #allocation1 [shape = 'u32[144,128]{1,0:T(1,128)}', space=vmem, size = 0x12000, scoped, tag = 'internal scratch']
  #allocation2 [shape = 'f32[36,32]{1,0:T(8,128)}', space=vmem, size = 0x5000, scoped, tag = 'scratch operand']
  %s0 = inlined_call_operand.vmem [shape: f32[2,16,4], index: 0, kind: input, shape index: {}]
  %s1 = inlined_call_operand.hbm [shape: f32[9,32,128], index: 1, kind: input, shape index: {}]
  %s2 = inlined_call_operand.vmem [shape: f32[3,1,128], index: 2, kind: input, shape index: {}]
  %s3 = inlined_call_operand.hbm [shape: f32[32,128], index: 3, kind: output, shape index: {}]
  %s4 = sld [smem:[#allocation0]]
  $region26: #{tpu_custom_call.1} parent=0
    _
  %s6 = ssub.s32 1, %s4
  %s7 = scalar_select 0, %s6, %s4
  $region1: #{tpu_custom_call.1} parent=0
    #allocation3 [shape = 'u8[147456]{0}', space=vmem, size = 0x24000, scoped, tag = 'input window, operand 1, single buffered']
    #allocation4 [shape = 's32[1]{0}', space=sflag, size = 0x4, scoped, tag = 'scoped memory for tpu_custom_call.1']
    #allocation5 [shape = 's32[1]{0}', space=sflag, size = 0x4, scoped, tag = 'scoped memory for tpu_custom_call.1']
    #allocation6 [shape = 'u8[16384]{0}', space=vmem, size = 0x4000, scoped, tag = 'output window, operand 0, single buffered']
    %8 = vsyncpa [#allocation4], 0
    %9 = vsyncpa [#allocation5], 0
    // Predicated region
    $region2: #{tpu_custom_call.1} parent=1 // pred_check
      _
    $region3: #{tpu_custom_call.1} parent=1 // pred_check_branch
      %11 = sbr.rel (0) target = $region5
    $region4: #{tpu_custom_call.1} parent=1 // pred_region
      _
    $region5: #{tpu_custom_call.1} parent=1 // pred_fallthru
      _
    // Predicated region
    $region6: #{tpu_custom_call.1} parent=1 // pred_check
      _
    $region7: #{tpu_custom_call.1} parent=1 // pred_check_branch
      %13 = sbr.rel (0) target = $region9
    $region8: #{tpu_custom_call.1} parent=1 // pred_region
      %s15 = ssub.s32 4608, 4608
      %16 = vsyncadd [#allocation4], %s15
      %s17 = sshll.u32 [#allocation3], 4
      %s18 = int_to_ptr.vmem [resolvable:$true] %s17
      %23 = dma.hbm_to_vmem [thread:$0]  %s1, 4608, %s18, [#allocation4], 128, 128, 8
    $region9: #{tpu_custom_call.1} parent=1 // pred_fallthru
      _
    // Predicated region
    $region10: #{tpu_custom_call.1} parent=1 // pred_check
      _
    $region11: #{tpu_custom_call.1} parent=1 // pred_check_branch
      %25 = sbr.rel (0) target = $region13
    $region12: #{tpu_custom_call.1} parent=1 // pred_region
      _
    $region13: #{tpu_custom_call.1} parent=1 // pred_fallthru
      _
    // Predicated region
    $region14: #{tpu_custom_call.1} parent=1 // pred_check
      _
    $region15: #{tpu_custom_call.1} parent=1 // pred_check_branch
      %27 = sbr.rel (0) target = $region17
    $region16: #{tpu_custom_call.1} parent=1 // pred_region
      %28 = dma.done [#allocation4], 4608
    $region17: #{tpu_custom_call.1} parent=1 // pred_fallthru
      _
    %vm29 = vcmask 261120
    %30 = vst.msk [vmem:[#allocation2] sm:$0xff] %vm29, 0.0
    %31 = vst.msk [vmem:[#allocation2 + $0x8] sm:$0xff] %vm29, 0.0
    %32 = vst.msk [vmem:[#allocation2 + $0x10] sm:$0xff] %vm29, 0.0
    %33 = vst.msk [vmem:[#allocation2 + $0x18] sm:$0xff] %vm29, 0.0
    %vm34 = vcmask 257024
    %35 = vst.msk [vmem:[#allocation2 + $0x20] sm:$0xf] %vm34, 0.0
    %v36 = vld [vmem:[%s0] sm:$0xff]
    %v37 = vld [vmem:[%s0 + $0x8] sm:$0xff]
    %vm38 = vcmask 31744
    %39 = vst.msk [vmem:[#allocation2 + $0x1] sm:$0xff] %vm38, %v36
    %40 = vst.msk [vmem:[#allocation2 + $0x9] sm:$0xff] %vm38, %v37
    %s41 = scalar_lea.vmem %s0, 16
    %v42 = vld [vmem:[%s41] sm:$0xff]
    %v43 = vld [vmem:[%s41 + $0x8] sm:$0xff]
    %44 = vst.msk [vmem:[#allocation2 + $0x13] sm:$0xff] %vm38, %v42
    %45 = vst.msk [vmem:[#allocation2 + $0x1b] sm:$0xff] %vm38, %v43
    %v46 = vld [vmem:[#allocation2] sm:$0xff]
    %v47 = vld [vmem:[#allocation2 + $0x8] sm:$0xff]
    %v48 = vld [vmem:[#allocation2 + $0x10] sm:$0xff]
    %v49 = vld [vmem:[#allocation2 + $0x18] sm:$0xff]
    %v50 = vld [vmem:[#allocation2 + $0x20] sm:$0x3]
    %v51 = vld [vmem:[#allocation3] sm:$0xff]
    %v52 = vld [vmem:[#allocation3 + $0x8] sm:$0xff]
    %v53 = vld [vmem:[#allocation3 + $0x10] sm:$0xff]
    %v54 = vld [vmem:[#allocation3 + $0x18] sm:$0xff]
    %v55 = vld [vmem:[#allocation2 + $0x1] sm:$0xff]
    %v56 = vld [vmem:[#allocation2 + $0x9] sm:$0xff]
    %v57 = vld [vmem:[#allocation2 + $0x11] sm:$0xff]
    %v58 = vld [vmem:[#allocation2 + $0x19] sm:$0xff]
    %v59 = vld [vmem:[#allocation2 + $0x21] sm:$0x3]
    %s60 = scalar_lea.vmem [#allocation3], 32
    %v61 = vld [vmem:[%s60] sm:$0xff]
    %v62 = vld [vmem:[%s60 + $0x8] sm:$0xff]
    %v63 = vld [vmem:[%s60 + $0x10] sm:$0xff]
    %v64 = vld [vmem:[%s60 + $0x18] sm:$0xff]
    %v66 = vsel %vm29, %v55, 0
    %v69 = vsel %vm29, %v56, 0
    %v72 = vsel %vm29, %v57, 0
    %v75 = vsel %vm29, %v58, 0
    %v78 = vsel %vm29, %v59, 0
    %80 = vmatprep.subr.mxu0 0.0
    %81 = vmatpush1.msra.mxu0 %v61
    %82 = vmatprep.subr.mxu0 0.0
    %83 = vmatpush1.msra.mxu0 %v62
    %84 = vmatprep.subr.mxu0 0.0
    %85 = vmatpush1.msra.mxu0 %v63
    %86 = vmatprep.subr.mxu0 0.0
    %87 = vmatpush1.msra.mxu0 %v64
    %88 = vmatprep.subr.mxu0 0.0
    %89 = vmatpush1.msra.mxu0 0.0
    %90 = vmatprep.subr.mxu0 0.0
    %91 = vmatpush1.msra.mxu0 0.0
    %92 = vmatprep.subr.mxu0 0.0
    %93 = vmatpush1.msra.mxu0 0.0
    %94 = vmatprep.subr.mxu0 0.0
    %95 = vmatpush1.msra.mxu0 0.0
    %96 = vmatprep.subr.mxu0 0.0
    %97 = vmatpush1.msra.mxu0 0.0
    %98 = vmatprep.subr.mxu0 0.0
    %99 = vmatpush1.msra.mxu0 0.0
    %100 = vmatprep.subr.mxu0 0.0
    %101 = vmatpush1.msra.mxu0 0.0
    %102 = vmatprep.subr.mxu0 0.0
    %103 = vmatpush1.msra.mxu0 0.0
    %104 = vmatprep.subr.mxu0 0.0
    %105 = vmatpush1.msra.mxu0 0.0
    %106 = vmatprep.subr.mxu0 0.0
    %107 = vmatpush1.msra.mxu0 0.0
    %108 = vmatprep.subr.mxu0 0.0
    %109 = vmatpush1.msra.mxu0 0.0
    %110 = vmatprep.subr.mxu0 0.0
    %111 = vmatpush1.msra.mxu0 0.0
    %112 = vmatprep.subr.mxu0 0.0
    %113 = vmatpush1.msra.mxu0 0.0
    %114 = vmatprep.subr.mxu0 0.0
    %115 = vmatpush1.msra.mxu0 0.0
    %116 = vmatprep.subr.mxu0 0.0
    %117 = vmatpush1.msra.mxu0 0.0
    %118 = vmatprep.subr.mxu0 0.0
    %119 = vmatpush1.msra.mxu0 0.0
    %120 = vmatprep.subr.mxu0 0.0
    %121 = vmatpush1.msra.mxu0 0.0
    %122 = vmatprep.subr.mxu0 0.0
    %123 = vmatpush1.msra.mxu0 0.0
    %124 = vmatprep.subr.mxu0 0.0
    %125 = vmatpush1.msra.mxu0 0.0
    %126 = vmatprep.subr.mxu0 0.0
    %127 = vmatpush1.msra.mxu0 0.0
    %128 = vmatprep.subr.mxu0 0.0
    %129 = vmatpush1.msra.mxu0 0.0
    %130 = vmatprep.subr.mxu0 0.0
    %131 = vmatpush1.msra.mxu0 0.0
    %132 = vmatprep.subr.mxu0 0.0
    %133 = vmatpush1.msra.mxu0 0.0
    %134 = vmatprep.subr.mxu0 0.0
    %135 = vmatpush1.msra.mxu0 0.0
    %136 = vmatprep.subr.mxu0 0.0
    %137 = vmatpush1.msra.mxu0 0.0
    %138 = vmatprep.subr.mxu0 0.0
    %139 = vmatpush1.msra.mxu0 0.0
    %140 = vmatprep.subr.mxu0 0.0
    %141 = vmatpush1.msra.mxu0 0.0
    %142 = vmatprep.subr.mxu0 0.0
    %143 = vmatpush1.msra.mxu0 0.0
    %144 = vmatprep.mubr.f32.mxu0 0.0
    %145 = vmatmul.mubr.f32.gmra.mrb[0].mxu0 %v66
    %v146 = vpop.f32.mrb[0].mxu0
    %v147 = vadd.f32 0.0, %v146
    %v148 = vpop.f32.mrb[0].mxu0
    %149 = vmatprep.mubr.f32.mxu0 0.0
    %150 = vmatmul.mubr.f32.gmra.mrb[0].mxu0 %v69
    %v151 = vpop.f32.mrb[0].mxu0
    %v152 = vadd.f32 0.0, %v151
    %v153 = vpop.f32.mrb[0].mxu0
    %154 = vmatprep.mubr.f32.mxu0 0.0
    %155 = vmatmul.mubr.f32.gmra.mrb[0].mxu0 %v72
    %v156 = vpop.f32.mrb[0].mxu0
    %v157 = vadd.f32 0.0, %v156
    %v158 = vpop.f32.mrb[0].mxu0
    %159 = vmatprep.mubr.f32.mxu0 0.0
    %160 = vmatmul.mubr.f32.gmra.mrb[0].mxu0 %v75
    %v161 = vpop.f32.mrb[0].mxu0
    %v162 = vadd.f32 0.0, %v161
    %v163 = vpop.f32.mrb[0].mxu0
    %164 = vmatprep.mubr.f32.mxu0 0.0
    %165 = vmatmul.mubr.f32.gmra.mrb[0].mxu0 %v78
    %v166 = vpop.f32.mrb[0].mxu0
    %v167 = vadd.f32 0.0, %v166
    %v168 = vpop.f32.mrb[0].mxu0
    %169 = vdwg.mxu0
    %v171 = vsel %vm29, %v46, 0
    %v174 = vsel %vm29, %v47, 0
    %v177 = vsel %vm29, %v48, 0
    %v180 = vsel %vm29, %v49, 0
    %v183 = vsel %vm29, %v50, 0
    %185 = vmatprep.subr.mxu0 0.0
    %186 = vmatpush1.msra.mxu0 %v51
    %187 = vmatprep.subr.mxu0 0.0
    %188 = vmatpush1.msra.mxu0 %v52
    %189 = vmatprep.subr.mxu0 0.0
    %190 = vmatpush1.msra.mxu0 %v53
    %191 = vmatprep.subr.mxu0 0.0
    %192 = vmatpush1.msra.mxu0 %v54
    %193 = vmatprep.subr.mxu0 0.0
    %194 = vmatpush1.msra.mxu0 0.0
    %195 = vmatprep.subr.mxu0 0.0
    %196 = vmatpush1.msra.mxu0 0.0
    %197 = vmatprep.subr.mxu0 0.0
    %198 = vmatpush1.msra.mxu0 0.0
    %199 = vmatprep.subr.mxu0 0.0
    %200 = vmatpush1.msra.mxu0 0.0
    %201 = vmatprep.subr.mxu0 0.0
    %202 = vmatpush1.msra.mxu0 0.0
    %203 = vmatprep.subr.mxu0 0.0
    %204 = vmatpush1.msra.mxu0 0.0
    %205 = vmatprep.subr.mxu0 0.0
    %206 = vmatpush1.msra.mxu0 0.0
    %207 = vmatprep.subr.mxu0 0.0
    %208 = vmatpush1.msra.mxu0 0.0
    %209 = vmatprep.subr.mxu0 0.0
    %210 = vmatpush1.msra.mxu0 0.0
    %211 = vmatprep.subr.mxu0 0.0
    %212 = vmatpush1.msra.mxu0 0.0
    %213 = vmatprep.subr.mxu0 0.0
    %214 = vmatpush1.msra.mxu0 0.0
    %215 = vmatprep.subr.mxu0 0.0
    %216 = vmatpush1.msra.mxu0 0.0
    %217 = vmatprep.subr.mxu0 0.0
    %218 = vmatpush1.msra.mxu0 0.0
    %219 = vmatprep.subr.mxu0 0.0
    %220 = vmatpush1.msra.mxu0 0.0
    %221 = vmatprep.subr.mxu0 0.0
    %222 = vmatpush1.msra.mxu0 0.0
    %223 = vmatprep.subr.mxu0 0.0
    %224 = vmatpush1.msra.mxu0 0.0
    %225 = vmatprep.subr.mxu0 0.0
    %226 = vmatpush1.msra.mxu0 0.0
    %227 = vmatprep.subr.mxu0 0.0
    %228 = vmatpush1.msra.mxu0 0.0
    %229 = vmatprep.subr.mxu0 0.0
    %230 = vmatpush1.msra.mxu0 0.0
    %231 = vmatprep.subr.mxu0 0.0
    %232 = vmatpush1.msra.mxu0 0.0
    %233 = vmatprep.subr.mxu0 0.0
    %234 = vmatpush1.msra.mxu0 0.0
    %235 = vmatprep.subr.mxu0 0.0
    %236 = vmatpush1.msra.mxu0 0.0
    %237 = vmatprep.subr.mxu0 0.0
    %238 = vmatpush1.msra.mxu0 0.0
    %239 = vmatprep.subr.mxu0 0.0
    %240 = vmatpush1.msra.mxu0 0.0
    %241 = vmatprep.subr.mxu0 0.0
    %242 = vmatpush1.msra.mxu0 0.0
    %243 = vmatprep.subr.mxu0 0.0
    %244 = vmatpush1.msra.mxu0 0.0
    %245 = vmatprep.subr.mxu0 0.0
    %246 = vmatpush1.msra.mxu0 0.0
    %247 = vmatprep.subr.mxu0 0.0
    %248 = vmatpush1.msra.mxu0 0.0
    %249 = vmatprep.mubr.f32.mxu0 0.0
    %250 = vmatmul.mubr.f32.gmra.mrb[0].mxu0 %v171
    %v251 = vpop.f32.mrb[0].mxu0
    %v252 = vadd.f32 %v147, %v251
    %v253 = vpop.f32.mrb[0].mxu0
    %254 = vmatprep.mubr.f32.mxu0 0.0
    %255 = vmatmul.mubr.f32.gmra.mrb[0].mxu0 %v174
    %v256 = vpop.f32.mrb[0].mxu0
    %v257 = vadd.f32 %v152, %v256
    %v258 = vpop.f32.mrb[0].mxu0
    %259 = vmatprep.mubr.f32.mxu0 0.0
    %260 = vmatmul.mubr.f32.gmra.mrb[0].mxu0 %v177
    %v261 = vpop.f32.mrb[0].mxu0
    %v262 = vadd.f32 %v157, %v261
    %v263 = vpop.f32.mrb[0].mxu0
    %264 = vmatprep.mubr.f32.mxu0 0.0
    %265 = vmatmul.mubr.f32.gmra.mrb[0].mxu0 %v180
    %v266 = vpop.f32.mrb[0].mxu0
    %v267 = vadd.f32 %v162, %v266
    %v268 = vpop.f32.mrb[0].mxu0
    %269 = vmatprep.mubr.f32.mxu0 0.0
    %270 = vmatmul.mubr.f32.gmra.mrb[0].mxu0 %v183
    %v271 = vpop.f32.mrb[0].mxu0
    %v272 = vadd.f32 %v167, %v271
    %v273 = vpop.f32.mrb[0].mxu0
    %274 = vdwg.mxu0
    %v275 = vld [vmem:[#allocation2 + $0x2] sm:$0xff]
    %v276 = vld [vmem:[#allocation2 + $0xa] sm:$0xff]
    %v277 = vld [vmem:[#allocation2 + $0x12] sm:$0xff]
    %v278 = vld [vmem:[#allocation2 + $0x1a] sm:$0xff]
    %v279 = vld [vmem:[#allocation2 + $0x22] sm:$0x3]
    %s280 = scalar_lea.vmem [#allocation3], 64
    %v281 = vld [vmem:[%s280] sm:$0xff]
    %v282 = vld [vmem:[%s280 + $0x8] sm:$0xff]
    %v283 = vld [vmem:[%s280 + $0x10] sm:$0xff]
    %v284 = vld [vmem:[%s280 + $0x18] sm:$0xff]
    %v286 = vsel %vm29, %v275, 0
    %v289 = vsel %vm29, %v276, 0
    %v292 = vsel %vm29, %v277, 0
    %v295 = vsel %vm29, %v278, 0
    %v298 = vsel %vm29, %v279, 0
    %300 = vmatprep.subr.mxu0 0.0
    %301 = vmatpush1.msra.mxu0 %v281
    %302 = vmatprep.subr.mxu0 0.0
    %303 = vmatpush1.msra.mxu0 %v282
    %304 = vmatprep.subr.mxu0 0.0
    %305 = vmatpush1.msra.mxu0 %v283
    %306 = vmatprep.subr.mxu0 0.0
    %307 = vmatpush1.msra.mxu0 %v284
    %308 = vmatprep.subr.mxu0 0.0
    %309 = vmatpush1.msra.mxu0 0.0
    %310 = vmatprep.subr.mxu0 0.0
    %311 = vmatpush1.msra.mxu0 0.0
    %312 = vmatprep.subr.mxu0 0.0
    %313 = vmatpush1.msra.mxu0 0.0
    %314 = vmatprep.subr.mxu0 0.0
    %315 = vmatpush1.msra.mxu0 0.0
    %316 = vmatprep.subr.mxu0 0.0
    %317 = vmatpush1.msra.mxu0 0.0
    %318 = vmatprep.subr.mxu0 0.0
    %319 = vmatpush1.msra.mxu0 0.0
    %320 = vmatprep.subr.mxu0 0.0
    %321 = vmatpush1.msra.mxu0 0.0
    %322 = vmatprep.subr.mxu0 0.0
    %323 = vmatpush1.msra.mxu0 0.0
    %324 = vmatprep.subr.mxu0 0.0
    %325 = vmatpush1.msra.mxu0 0.0
    %326 = vmatprep.subr.mxu0 0.0
    %327 = vmatpush1.msra.mxu0 0.0
    %328 = vmatprep.subr.mxu0 0.0
    %329 = vmatpush1.msra.mxu0 0.0
    %330 = vmatprep.subr.mxu0 0.0
    %331 = vmatpush1.msra.mxu0 0.0
    %332 = vmatprep.subr.mxu0 0.0
    %333 = vmatpush1.msra.mxu0 0.0
    %334 = vmatprep.subr.mxu0 0.0
    %335 = vmatpush1.msra.mxu0 0.0
    %336 = vmatprep.subr.mxu0 0.0
    %337 = vmatpush1.msra.mxu0 0.0
    %338 = vmatprep.subr.mxu0 0.0
    %339 = vmatpush1.msra.mxu0 0.0
    %340 = vmatprep.subr.mxu0 0.0
    %341 = vmatpush1.msra.mxu0 0.0
    %342 = vmatprep.subr.mxu0 0.0
    %343 = vmatpush1.msra.mxu0 0.0
    %344 = vmatprep.subr.mxu0 0.0
    %345 = vmatpush1.msra.mxu0 0.0
    %346 = vmatprep.subr.mxu0 0.0
    %347 = vmatpush1.msra.mxu0 0.0
    %348 = vmatprep.subr.mxu0 0.0
    %349 = vmatpush1.msra.mxu0 0.0
    %350 = vmatprep.subr.mxu0 0.0
    %351 = vmatpush1.msra.mxu0 0.0
    %352 = vmatprep.subr.mxu0 0.0
    %353 = vmatpush1.msra.mxu0 0.0
    %354 = vmatprep.subr.mxu0 0.0
    %355 = vmatpush1.msra.mxu0 0.0
    %356 = vmatprep.subr.mxu0 0.0
    %357 = vmatpush1.msra.mxu0 0.0
    %358 = vmatprep.subr.mxu0 0.0
    %359 = vmatpush1.msra.mxu0 0.0
    %360 = vmatprep.subr.mxu0 0.0
    %361 = vmatpush1.msra.mxu0 0.0
    %362 = vmatprep.subr.mxu0 0.0
    %363 = vmatpush1.msra.mxu0 0.0
    %364 = vmatprep.mubr.f32.mxu0 0.0
    %365 = vmatmul.mubr.f32.gmra.mrb[0].mxu0 %v286
    %v366 = vpop.f32.mrb[0].mxu0
    %v367 = vadd.f32 0.0, %v366
    %v368 = vpop.f32.mrb[0].mxu0
    %369 = vmatprep.mubr.f32.mxu0 0.0
    %370 = vmatmul.mubr.f32.gmra.mrb[0].mxu0 %v289
    %v371 = vpop.f32.mrb[0].mxu0
    %v372 = vadd.f32 0.0, %v371
    %v373 = vpop.f32.mrb[0].mxu0
    %374 = vmatprep.mubr.f32.mxu0 0.0
    %375 = vmatmul.mubr.f32.gmra.mrb[0].mxu0 %v292
    %v376 = vpop.f32.mrb[0].mxu0
    %v377 = vadd.f32 0.0, %v376
    %v378 = vpop.f32.mrb[0].mxu0
    %379 = vmatprep.mubr.f32.mxu0 0.0
    %380 = vmatmul.mubr.f32.gmra.mrb[0].mxu0 %v295
    %v381 = vpop.f32.mrb[0].mxu0
    %v382 = vadd.f32 0.0, %v381
    %v383 = vpop.f32.mrb[0].mxu0
    %384 = vmatprep.mubr.f32.mxu0 0.0
    %385 = vmatmul.mubr.f32.gmra.mrb[0].mxu0 %v298
    %v386 = vpop.f32.mrb[0].mxu0
    %v387 = vadd.f32 0.0, %v386
    %v388 = vpop.f32.mrb[0].mxu0
    %389 = vdwg.mxu0
    %v390 = vadd.f32 %v252, %v367
    %v391 = vadd.f32 %v257, %v372
    %v392 = vadd.f32 %v262, %v377
    %v393 = vadd.f32 %v267, %v382
    %v394 = vadd.f32 %v272, %v387
    %v395 = vld [vmem:[%s2] sm:$0x1]
    %v397 = vlaneseq
    %v398 = vshrl.u32 %v397, 7
    %v399 = vsub.s32 0, %v398
    %v400 = vrot.slane %v395, %v399
    %v402 = vadd.f32 %v390, %v400
    %v403 = vadd.f32 %v391, %v400
    %vm404 = vcmp.gt.f32.partialorder %v402, 0.0
    %vm405 = vcmp.gt.f32.partialorder %v403, 0.0
    %v406 = vmin.f32 %v402, 0.0
    %v407 = vmin.f32 %v403, 0.0
    %v408 = vmul.f32 %v406, 1.442695
    %v409 = vpow.pop %v408
    %v410 = vmul.f32 %v407, 1.442695
    %v411 = vpow.pop %v410
    %v412 = vsub.f32 %v409, 1.0
    %v413 = vsub.f32 %v411, 1.0
    %v414 = vsel %vm404, %v402, %v412
    %v415 = vsel %vm405, %v403, %v413
    %418 = vrot.lane.b32.xlu0 %v414, 8
    %v419 = vpop.permute.xlu0 %418
    %420 = vrot.lane.b32.xlu0 %v415, 8
    %v421 = vpop.permute.xlu0 %420
    %vm424 = vcmask 130112
    %425 = vst.msk [vmem:[#allocation2 + $0x1] sm:$0xff] %vm424, %v419
    %426 = vst.msk [vmem:[#allocation2 + $0x9] sm:$0xff] %vm424, %v421
    %v427 = vadd.f32 %v392, %v400
    %v428 = vadd.f32 %v393, %v400
    %v429 = vadd.f32 %v394, %v400
    %vm430 = vcmp.gt.f32.partialorder %v427, 0.0
    %vm431 = vcmp.gt.f32.partialorder %v428, 0.0
    %vm432 = vcmp.gt.f32.partialorder %v429, 0.0
    %v433 = vmin.f32 %v427, 0.0
    %v434 = vmin.f32 %v428, 0.0
    %v435 = vmin.f32 %v429, 0.0
    %v436 = vmul.f32 %v433, 1.442695
    %v437 = vpow.pop %v436
    %v438 = vmul.f32 %v434, 1.442695
    %v439 = vpow.pop %v438
    %v440 = vmul.f32 %v435, 1.442695
    %v441 = vpow.pop %v440
    %v442 = vsub.f32 %v437, 1.0
    %v443 = vsub.f32 %v439, 1.0
    %v444 = vsub.f32 %v441, 1.0
    %v445 = vsel %vm430, %v427, %v442
    %v446 = vsel %vm431, %v428, %v443
    %v447 = vsel %vm432, %v429, %v444
    %451 = vrot.lane.b32.xlu0 %v445, 8
    %v452 = vpop.permute.xlu0 %451
    %453 = vrot.lane.b32.xlu0 %v446, 8
    %v454 = vpop.permute.xlu0 %453
    %455 = vrot.lane.b32.xlu0 %v447, 8
    %v456 = vpop.permute.xlu0 %455
    %vm460 = vcmask 130114
    %461 = vst.msk [vmem:[#allocation2 + $0x11] sm:$0xfc] %vm460, %v452
    %462 = vst.msk [vmem:[#allocation2 + $0x19] sm:$0xff] %vm424, %v454
    %vm463 = vcmask 123968
    %464 = vst.msk [vmem:[#allocation2 + $0x21] sm:$0x3] %vm463, %v456
    %v465 = vld [vmem:[#allocation2] sm:$0xff]
    %v466 = vld [vmem:[#allocation2 + $0x8] sm:$0xff]
    %v467 = vld [vmem:[#allocation2 + $0x10] sm:$0xff]
    %v468 = vld [vmem:[#allocation2 + $0x18] sm:$0xff]
    %v469 = vld [vmem:[#allocation2 + $0x20] sm:$0x3]
    %s470 = scalar_lea.vmem [#allocation3], 96
    %v471 = vld [vmem:[%s470] sm:$0xff]
    %v472 = vld [vmem:[%s470 + $0x8] sm:$0xff]
    %v473 = vld [vmem:[%s470 + $0x10] sm:$0xff]
    %v474 = vld [vmem:[%s470 + $0x18] sm:$0xff]
    %v475 = vld [vmem:[#allocation2 + $0x1] sm:$0xff]
    %v476 = vld [vmem:[#allocation2 + $0x9] sm:$0xff]
    %v477 = vld [vmem:[#allocation2 + $0x11] sm:$0xff]
    %v478 = vld [vmem:[#allocation2 + $0x19] sm:$0xff]
    %v479 = vld [vmem:[#allocation2 + $0x21] sm:$0x3]
    %s480 = scalar_lea.vmem [#allocation3], 128
    %v481 = vld [vmem:[%s480] sm:$0xff]
    %v482 = vld [vmem:[%s480 + $0x8] sm:$0xff]
    %v483 = vld [vmem:[%s480 + $0x10] sm:$0xff]
    %v484 = vld [vmem:[%s480 + $0x18] sm:$0xff]
    %v486 = vsel %vm29, %v475, 0
    %v489 = vsel %vm29, %v476, 0
    %v492 = vsel %vm29, %v477, 0
    %v495 = vsel %vm29, %v478, 0
    %v498 = vsel %vm29, %v479, 0
    %500 = vmatprep.subr.mxu0 0.0
    %501 = vmatpush1.msra.mxu0 %v481
    %502 = vmatprep.subr.mxu0 0.0
    %503 = vmatpush1.msra.mxu0 %v482
    %504 = vmatprep.subr.mxu0 0.0
    %505 = vmatpush1.msra.mxu0 %v483
    %506 = vmatprep.subr.mxu0 0.0
    %507 = vmatpush1.msra.mxu0 %v484
    %508 = vmatprep.subr.mxu0 0.0
    %509 = vmatpush1.msra.mxu0 0.0
    %510 = vmatprep.subr.mxu0 0.0
    %511 = vmatpush1.msra.mxu0 0.0
    %512 = vmatprep.subr.mxu0 0.0
    %513 = vmatpush1.msra.mxu0 0.0
    %514 = vmatprep.subr.mxu0 0.0
    %515 = vmatpush1.msra.mxu0 0.0
    %516 = vmatprep.subr.mxu0 0.0
    %517 = vmatpush1.msra.mxu0 0.0
    %518 = vmatprep.subr.mxu0 0.0
    %519 = vmatpush1.msra.mxu0 0.0
    %520 = vmatprep.subr.mxu0 0.0
    %521 = vmatpush1.msra.mxu0 0.0
    %522 = vmatprep.subr.mxu0 0.0
    %523 = vmatpush1.msra.mxu0 0.0
    %524 = vmatprep.subr.mxu0 0.0
    %525 = vmatpush1.msra.mxu0 0.0
    %526 = vmatprep.subr.mxu0 0.0
    %527 = vmatpush1.msra.mxu0 0.0
    %528 = vmatprep.subr.mxu0 0.0
    %529 = vmatpush1.msra.mxu0 0.0
    %530 = vmatprep.subr.mxu0 0.0
    %531 = vmatpush1.msra.mxu0 0.0
    %532 = vmatprep.subr.mxu0 0.0
    %533 = vmatpush1.msra.mxu0 0.0
    %534 = vmatprep.subr.mxu0 0.0
    %535 = vmatpush1.msra.mxu0 0.0
    %536 = vmatprep.subr.mxu0 0.0
    %537 = vmatpush1.msra.mxu0 0.0
    %538 = vmatprep.subr.mxu0 0.0
    %539 = vmatpush1.msra.mxu0 0.0
    %540 = vmatprep.subr.mxu0 0.0
    %541 = vmatpush1.msra.mxu0 0.0
    %542 = vmatprep.subr.mxu0 0.0
    %543 = vmatpush1.msra.mxu0 0.0
    %544 = vmatprep.subr.mxu0 0.0
    %545 = vmatpush1.msra.mxu0 0.0
    %546 = vmatprep.subr.mxu0 0.0
    %547 = vmatpush1.msra.mxu0 0.0
    %548 = vmatprep.subr.mxu0 0.0
    %549 = vmatpush1.msra.mxu0 0.0
    %550 = vmatprep.subr.mxu0 0.0
    %551 = vmatpush1.msra.mxu0 0.0
    %552 = vmatprep.subr.mxu0 0.0
    %553 = vmatpush1.msra.mxu0 0.0
    %554 = vmatprep.subr.mxu0 0.0
    %555 = vmatpush1.msra.mxu0 0.0
    %556 = vmatprep.subr.mxu0 0.0
    %557 = vmatpush1.msra.mxu0 0.0
    %558 = vmatprep.subr.mxu0 0.0
    %559 = vmatpush1.msra.mxu0 0.0
    %560 = vmatprep.subr.mxu0 0.0
    %561 = vmatpush1.msra.mxu0 0.0
    %562 = vmatprep.subr.mxu0 0.0
    %563 = vmatpush1.msra.mxu0 0.0
    %564 = vmatprep.mubr.f32.mxu0 0.0
    %565 = vmatmul.mubr.f32.gmra.mrb[0].mxu0 %v486
    %v566 = vpop.f32.mrb[0].mxu0
    %v567 = vadd.f32 0.0, %v566
    %v568 = vpop.f32.mrb[0].mxu0
    %569 = vmatprep.mubr.f32.mxu0 0.0
    %570 = vmatmul.mubr.f32.gmra.mrb[0].mxu0 %v489
    %v571 = vpop.f32.mrb[0].mxu0
    %v572 = vadd.f32 0.0, %v571
    %v573 = vpop.f32.mrb[0].mxu0
    %574 = vmatprep.mubr.f32.mxu0 0.0
    %575 = vmatmul.mubr.f32.gmra.mrb[0].mxu0 %v492
    %v576 = vpop.f32.mrb[0].mxu0
    %v577 = vadd.f32 0.0, %v576
    %v578 = vpop.f32.mrb[0].mxu0
    %579 = vmatprep.mubr.f32.mxu0 0.0
    %580 = vmatmul.mubr.f32.gmra.mrb[0].mxu0 %v495
    %v581 = vpop.f32.mrb[0].mxu0
    %v582 = vadd.f32 0.0, %v581
    %v583 = vpop.f32.mrb[0].mxu0
    %584 = vmatprep.mubr.f32.mxu0 0.0
    %585 = vmatmul.mubr.f32.gmra.mrb[0].mxu0 %v498
    %v586 = vpop.f32.mrb[0].mxu0
    %v587 = vadd.f32 0.0, %v586
    %v588 = vpop.f32.mrb[0].mxu0
    %589 = vdwg.mxu0
    %v591 = vsel %vm29, %v465, 0
    %v594 = vsel %vm29, %v466, 0
    %v597 = vsel %vm29, %v467, 0
    %v600 = vsel %vm29, %v468, 0
    %v603 = vsel %vm29, %v469, 0
    %605 = vmatprep.subr.mxu0 0.0
    %606 = vmatpush1.msra.mxu0 %v471
    %607 = vmatprep.subr.mxu0 0.0
    %608 = vmatpush1.msra.mxu0 %v472
    %609 = vmatprep.subr.mxu0 0.0
    %610 = vmatpush1.msra.mxu0 %v473
    %611 = vmatprep.subr.mxu0 0.0
    %612 = vmatpush1.msra.mxu0 %v474
    %613 = vmatprep.subr.mxu0 0.0
    %614 = vmatpush1.msra.mxu0 0.0
    %615 = vmatprep.subr.mxu0 0.0
    %616 = vmatpush1.msra.mxu0 0.0
    %617 = vmatprep.subr.mxu0 0.0
    %618 = vmatpush1.msra.mxu0 0.0
    %619 = vmatprep.subr.mxu0 0.0
    %620 = vmatpush1.msra.mxu0 0.0
    %621 = vmatprep.subr.mxu0 0.0
    %622 = vmatpush1.msra.mxu0 0.0
    %623 = vmatprep.subr.mxu0 0.0
    %624 = vmatpush1.msra.mxu0 0.0
    %625 = vmatprep.subr.mxu0 0.0
    %626 = vmatpush1.msra.mxu0 0.0
    %627 = vmatprep.subr.mxu0 0.0
    %628 = vmatpush1.msra.mxu0 0.0
    %629 = vmatprep.subr.mxu0 0.0
    %630 = vmatpush1.msra.mxu0 0.0
    %631 = vmatprep.subr.mxu0 0.0
    %632 = vmatpush1.msra.mxu0 0.0
    %633 = vmatprep.subr.mxu0 0.0
    %634 = vmatpush1.msra.mxu0 0.0
    %635 = vmatprep.subr.mxu0 0.0
    %636 = vmatpush1.msra.mxu0 0.0
    %637 = vmatprep.subr.mxu0 0.0
    %638 = vmatpush1.msra.mxu0 0.0
    %639 = vmatprep.subr.mxu0 0.0
    %640 = vmatpush1.msra.mxu0 0.0
    %641 = vmatprep.subr.mxu0 0.0
    %642 = vmatpush1.msra.mxu0 0.0
    %643 = vmatprep.subr.mxu0 0.0
    %644 = vmatpush1.msra.mxu0 0.0
    %645 = vmatprep.subr.mxu0 0.0
    %646 = vmatpush1.msra.mxu0 0.0
    %647 = vmatprep.subr.mxu0 0.0
    %648 = vmatpush1.msra.mxu0 0.0
    %649 = vmatprep.subr.mxu0 0.0
    %650 = vmatpush1.msra.mxu0 0.0
    %651 = vmatprep.subr.mxu0 0.0
    %652 = vmatpush1.msra.mxu0 0.0
    %653 = vmatprep.subr.mxu0 0.0
    %654 = vmatpush1.msra.mxu0 0.0
    %655 = vmatprep.subr.mxu0 0.0
    %656 = vmatpush1.msra.mxu0 0.0
    %657 = vmatprep.subr.mxu0 0.0
    %658 = vmatpush1.msra.mxu0 0.0
    %659 = vmatprep.subr.mxu0 0.0
    %660 = vmatpush1.msra.mxu0 0.0
    %661 = vmatprep.subr.mxu0 0.0
    %662 = vmatpush1.msra.mxu0 0.0
    %663 = vmatprep.subr.mxu0 0.0
    %664 = vmatpush1.msra.mxu0 0.0
    %665 = vmatprep.subr.mxu0 0.0
    %666 = vmatpush1.msra.mxu0 0.0
    %667 = vmatprep.subr.mxu0 0.0
    %668 = vmatpush1.msra.mxu0 0.0
    %669 = vmatprep.mubr.f32.mxu0 0.0
    %670 = vmatmul.mubr.f32.gmra.mrb[0].mxu0 %v591
    %v671 = vpop.f32.mrb[0].mxu0
    %v672 = vadd.f32 %v567, %v671
    %v673 = vpop.f32.mrb[0].mxu0
    %674 = vmatprep.mubr.f32.mxu0 0.0
    %675 = vmatmul.mubr.f32.gmra.mrb[0].mxu0 %v594
    %v676 = vpop.f32.mrb[0].mxu0
    %v677 = vadd.f32 %v572, %v676
    %v678 = vpop.f32.mrb[0].mxu0
    %679 = vmatprep.mubr.f32.mxu0 0.0
    %680 = vmatmul.mubr.f32.gmra.mrb[0].mxu0 %v597
    %v681 = vpop.f32.mrb[0].mxu0
    %v682 = vadd.f32 %v577, %v681
    %v683 = vpop.f32.mrb[0].mxu0
    %684 = vmatprep.mubr.f32.mxu0 0.0
    %685 = vmatmul.mubr.f32.gmra.mrb[0].mxu0 %v600
    %v686 = vpop.f32.mrb[0].mxu0
    %v687 = vadd.f32 %v582, %v686
    %v688 = vpop.f32.mrb[0].mxu0
    %689 = vmatprep.mubr.f32.mxu0 0.0
    %690 = vmatmul.mubr.f32.gmra.mrb[0].mxu0 %v603
    %v691 = vpop.f32.mrb[0].mxu0
    %v692 = vadd.f32 %v587, %v691
    %v693 = vpop.f32.mrb[0].mxu0
    %694 = vdwg.mxu0
    %v695 = vld [vmem:[#allocation2 + $0x2] sm:$0xff]
    %v696 = vld [vmem:[#allocation2 + $0xa] sm:$0xff]
    %v697 = vld [vmem:[#allocation2 + $0x12] sm:$0xff]
    %v698 = vld [vmem:[#allocation2 + $0x1a] sm:$0xff]
    %v699 = vld [vmem:[#allocation2 + $0x22] sm:$0x3]
    %s700 = scalar_lea.vmem [#allocation3], 160
    %v701 = vld [vmem:[%s700] sm:$0xff]
    %v702 = vld [vmem:[%s700 + $0x8] sm:$0xff]
    %v703 = vld [vmem:[%s700 + $0x10] sm:$0xff]
    %v704 = vld [vmem:[%s700 + $0x18] sm:$0xff]
    %v706 = vsel %vm29, %v695, 0
    %v709 = vsel %vm29, %v696, 0
    %v712 = vsel %vm29, %v697, 0
    %v715 = vsel %vm29, %v698, 0
    %v718 = vsel %vm29, %v699, 0
    %720 = vmatprep.subr.mxu0 0.0
    %721 = vmatpush1.msra.mxu0 %v701
    %722 = vmatprep.subr.mxu0 0.0
    %723 = vmatpush1.msra.mxu0 %v702
    %724 = vmatprep.subr.mxu0 0.0
    %725 = vmatpush1.msra.mxu0 %v703
    %726 = vmatprep.subr.mxu0 0.0
    %727 = vmatpush1.msra.mxu0 %v704
    %728 = vmatprep.subr.mxu0 0.0
    %729 = vmatpush1.msra.mxu0 0.0
    %730 = vmatprep.subr.mxu0 0.0
    %731 = vmatpush1.msra.mxu0 0.0
    %732 = vmatprep.subr.mxu0 0.0
    %733 = vmatpush1.msra.mxu0 0.0
    %734 = vmatprep.subr.mxu0 0.0
    %735 = vmatpush1.msra.mxu0 0.0
    %736 = vmatprep.subr.mxu0 0.0
    %737 = vmatpush1.msra.mxu0 0.0
    %738 = vmatprep.subr.mxu0 0.0
    %739 = vmatpush1.msra.mxu0 0.0
    %740 = vmatprep.subr.mxu0 0.0
    %741 = vmatpush1.msra.mxu0 0.0
    %742 = vmatprep.subr.mxu0 0.0
    %743 = vmatpush1.msra.mxu0 0.0
    %744 = vmatprep.subr.mxu0 0.0
    %745 = vmatpush1.msra.mxu0 0.0
    %746 = vmatprep.subr.mxu0 0.0
    %747 = vmatpush1.msra.mxu0 0.0
    %748 = vmatprep.subr.mxu0 0.0
    %749 = vmatpush1.msra.mxu0 0.0
    %750 = vmatprep.subr.mxu0 0.0
    %751 = vmatpush1.msra.mxu0 0.0
    %752 = vmatprep.subr.mxu0 0.0
    %753 = vmatpush1.msra.mxu0 0.0
    %754 = vmatprep.subr.mxu0 0.0
    %755 = vmatpush1.msra.mxu0 0.0
    %756 = vmatprep.subr.mxu0 0.0
    %757 = vmatpush1.msra.mxu0 0.0
    %758 = vmatprep.subr.mxu0 0.0
    %759 = vmatpush1.msra.mxu0 0.0
    %760 = vmatprep.subr.mxu0 0.0
    %761 = vmatpush1.msra.mxu0 0.0
    %762 = vmatprep.subr.mxu0 0.0
    %763 = vmatpush1.msra.mxu0 0.0
    %764 = vmatprep.subr.mxu0 0.0
    %765 = vmatpush1.msra.mxu0 0.0
    %766 = vmatprep.subr.mxu0 0.0
    %767 = vmatpush1.msra.mxu0 0.0
    %768 = vmatprep.subr.mxu0 0.0
    %769 = vmatpush1.msra.mxu0 0.0
    %770 = vmatprep.subr.mxu0 0.0
    %771 = vmatpush1.msra.mxu0 0.0
    %772 = vmatprep.subr.mxu0 0.0
    %773 = vmatpush1.msra.mxu0 0.0
    %774 = vmatprep.subr.mxu0 0.0
    %775 = vmatpush1.msra.mxu0 0.0
    %776 = vmatprep.subr.mxu0 0.0
    %777 = vmatpush1.msra.mxu0 0.0
    %778 = vmatprep.subr.mxu0 0.0
    %779 = vmatpush1.msra.mxu0 0.0
    %780 = vmatprep.subr.mxu0 0.0
    %781 = vmatpush1.msra.mxu0 0.0
    %782 = vmatprep.subr.mxu0 0.0
    %783 = vmatpush1.msra.mxu0 0.0
    %784 = vmatprep.mubr.f32.mxu0 0.0
    %785 = vmatmul.mubr.f32.gmra.mrb[0].mxu0 %v706
    %v786 = vpop.f32.mrb[0].mxu0
    %v787 = vadd.f32 0.0, %v786
    %v788 = vpop.f32.mrb[0].mxu0
    %789 = vmatprep.mubr.f32.mxu0 0.0
    %790 = vmatmul.mubr.f32.gmra.mrb[0].mxu0 %v709
    %v791 = vpop.f32.mrb[0].mxu0
    %v792 = vadd.f32 0.0, %v791
    %v793 = vpop.f32.mrb[0].mxu0
    %794 = vmatprep.mubr.f32.mxu0 0.0
    %795 = vmatmul.mubr.f32.gmra.mrb[0].mxu0 %v712
    %v796 = vpop.f32.mrb[0].mxu0
    %v797 = vadd.f32 0.0, %v796
    %v798 = vpop.f32.mrb[0].mxu0
    %799 = vmatprep.mubr.f32.mxu0 0.0
    %800 = vmatmul.mubr.f32.gmra.mrb[0].mxu0 %v715
    %v801 = vpop.f32.mrb[0].mxu0
    %v802 = vadd.f32 0.0, %v801
    %v803 = vpop.f32.mrb[0].mxu0
    %804 = vmatprep.mubr.f32.mxu0 0.0
    %805 = vmatmul.mubr.f32.gmra.mrb[0].mxu0 %v718
    %v806 = vpop.f32.mrb[0].mxu0
    %v807 = vadd.f32 0.0, %v806
    %v808 = vpop.f32.mrb[0].mxu0
    %809 = vdwg.mxu0
    %v810 = vadd.f32 %v672, %v787
    %v811 = vadd.f32 %v677, %v792
    %v812 = vadd.f32 %v682, %v797
    %v813 = vadd.f32 %v687, %v802
    %v814 = vadd.f32 %v692, %v807
    %s815 = scalar_lea.vmem %s2, 1
    %v816 = vld [vmem:[%s815] sm:$0x1]
    %v818 = vlaneseq
    %v819 = vshrl.u32 %v818, 7
    %v820 = vsub.s32 0, %v819
    %v821 = vrot.slane %v816, %v820
    %v823 = vadd.f32 %v810, %v821
    %v824 = vadd.f32 %v811, %v821
    %vm825 = vcmp.gt.f32.partialorder %v823, 0.0
    %vm826 = vcmp.gt.f32.partialorder %v824, 0.0
    %v827 = vmin.f32 %v823, 0.0
    %v828 = vmin.f32 %v824, 0.0
    %v829 = vmul.f32 %v827, 1.442695
    %v830 = vpow.pop %v829
    %v831 = vmul.f32 %v828, 1.442695
    %v832 = vpow.pop %v831
    %v833 = vsub.f32 %v830, 1.0
    %v834 = vsub.f32 %v832, 1.0
    %v835 = vsel %vm825, %v823, %v833
    %v836 = vsel %vm826, %v824, %v834
    %839 = vrot.lane.b32.xlu0 %v835, 16
    %v840 = vpop.permute.xlu0 %839
    %841 = vrot.lane.b32.xlu0 %v836, 16
    %v842 = vpop.permute.xlu0 %841
    %vm845 = vcmask 195712
    %846 = vst.msk [vmem:[#allocation2 + $0x1] sm:$0xff] %vm845, %v840
    %847 = vst.msk [vmem:[#allocation2 + $0x9] sm:$0xff] %vm845, %v842
    %v848 = vadd.f32 %v812, %v821
    %v849 = vadd.f32 %v813, %v821
    %v850 = vadd.f32 %v814, %v821
    %vm851 = vcmp.gt.f32.partialorder %v848, 0.0
    %vm852 = vcmp.gt.f32.partialorder %v849, 0.0
    %vm853 = vcmp.gt.f32.partialorder %v850, 0.0
    %v854 = vmin.f32 %v848, 0.0
    %v855 = vmin.f32 %v849, 0.0
    %v856 = vmin.f32 %v850, 0.0
    %v857 = vmul.f32 %v854, 1.442695
    %v858 = vpow.pop %v857
    %v859 = vmul.f32 %v855, 1.442695
    %v860 = vpow.pop %v859
    %v861 = vmul.f32 %v856, 1.442695
    %v862 = vpow.pop %v861
    %v863 = vsub.f32 %v858, 1.0
    %v864 = vsub.f32 %v860, 1.0
    %v865 = vsub.f32 %v862, 1.0
    %v866 = vsel %vm851, %v848, %v863
    %v867 = vsel %vm852, %v849, %v864
    %v868 = vsel %vm853, %v850, %v865
    %872 = vrot.lane.b32.xlu0 %v866, 16
    %v873 = vpop.permute.xlu0 %872
    %874 = vrot.lane.b32.xlu0 %v867, 16
    %v875 = vpop.permute.xlu0 %874
    %876 = vrot.lane.b32.xlu0 %v868, 16
    %v877 = vpop.permute.xlu0 %876
    %vm881 = vcmask 195714
    %882 = vst.msk [vmem:[#allocation2 + $0x11] sm:$0xfc] %vm881, %v873
    %883 = vst.msk [vmem:[#allocation2 + $0x19] sm:$0xff] %vm845, %v875
    %vm884 = vcmask 189568
    %885 = vst.msk [vmem:[#allocation2 + $0x21] sm:$0x3] %vm884, %v877
    %v886 = vld [vmem:[#allocation2] sm:$0xff]
    %v887 = vld [vmem:[#allocation2 + $0x8] sm:$0xff]
    %v888 = vld [vmem:[#allocation2 + $0x10] sm:$0xff]
    %v889 = vld [vmem:[#allocation2 + $0x18] sm:$0xff]
    %v890 = vld [vmem:[#allocation2 + $0x20] sm:$0x3]
    %s891 = scalar_lea.vmem [#allocation3], 192
    %v892 = vld [vmem:[%s891] sm:$0xff]
    %v893 = vld [vmem:[%s891 + $0x8] sm:$0xff]
    %v894 = vld [vmem:[%s891 + $0x10] sm:$0xff]
    %v895 = vld [vmem:[%s891 + $0x18] sm:$0xff]
    %v896 = vld [vmem:[#allocation2 + $0x1] sm:$0xff]
    %v897 = vld [vmem:[#allocation2 + $0x9] sm:$0xff]
    %v898 = vld [vmem:[#allocation2 + $0x11] sm:$0xff]
    %v899 = vld [vmem:[#allocation2 + $0x19] sm:$0xff]
    %v900 = vld [vmem:[#allocation2 + $0x21] sm:$0x3]
    %s901 = scalar_lea.vmem [#allocation3], 224
    %v902 = vld [vmem:[%s901] sm:$0xff]
    %v903 = vld [vmem:[%s901 + $0x8] sm:$0xff]
    %v904 = vld [vmem:[%s901 + $0x10] sm:$0xff]
    %v905 = vld [vmem:[%s901 + $0x18] sm:$0xff]
    %v907 = vsel %vm29, %v896, 0
    %v910 = vsel %vm29, %v897, 0
    %v913 = vsel %vm29, %v898, 0
    %v916 = vsel %vm29, %v899, 0
    %v919 = vsel %vm29, %v900, 0
    %921 = vmatprep.subr.mxu0 0.0
    %922 = vmatpush1.msra.mxu0 %v902
    %923 = vmatprep.subr.mxu0 0.0
    %924 = vmatpush1.msra.mxu0 %v903
    %925 = vmatprep.subr.mxu0 0.0
    %926 = vmatpush1.msra.mxu0 %v904
    %927 = vmatprep.subr.mxu0 0.0
    %928 = vmatpush1.msra.mxu0 %v905
    %929 = vmatprep.subr.mxu0 0.0
    %930 = vmatpush1.msra.mxu0 0.0
    %931 = vmatprep.subr.mxu0 0.0
    %932 = vmatpush1.msra.mxu0 0.0
    %933 = vmatprep.subr.mxu0 0.0
    %934 = vmatpush1.msra.mxu0 0.0
    %935 = vmatprep.subr.mxu0 0.0
    %936 = vmatpush1.msra.mxu0 0.0
    %937 = vmatprep.subr.mxu0 0.0
    %938 = vmatpush1.msra.mxu0 0.0
    %939 = vmatprep.subr.mxu0 0.0
    %940 = vmatpush1.msra.mxu0 0.0
    %941 = vmatprep.subr.mxu0 0.0
    %942 = vmatpush1.msra.mxu0 0.0
    %943 = vmatprep.subr.mxu0 0.0
    %944 = vmatpush1.msra.mxu0 0.0
    %945 = vmatprep.subr.mxu0 0.0
    %946 = vmatpush1.msra.mxu0 0.0
    %947 = vmatprep.subr.mxu0 0.0
    %948 = vmatpush1.msra.mxu0 0.0
    %949 = vmatprep.subr.mxu0 0.0
    %950 = vmatpush1.msra.mxu0 0.0
    %951 = vmatprep.subr.mxu0 0.0
    %952 = vmatpush1.msra.mxu0 0.0
    %953 = vmatprep.subr.mxu0 0.0
    %954 = vmatpush1.msra.mxu0 0.0
    %955 = vmatprep.subr.mxu0 0.0
    %956 = vmatpush1.msra.mxu0 0.0
    %957 = vmatprep.subr.mxu0 0.0
    %958 = vmatpush1.msra.mxu0 0.0
    %959 = vmatprep.subr.mxu0 0.0
    %960 = vmatpush1.msra.mxu0 0.0
    %961 = vmatprep.subr.mxu0 0.0
    %962 = vmatpush1.msra.mxu0 0.0
    %963 = vmatprep.subr.mxu0 0.0
    %964 = vmatpush1.msra.mxu0 0.0
    %965 = vmatprep.subr.mxu0 0.0
    %966 = vmatpush1.msra.mxu0 0.0
    %967 = vmatprep.subr.mxu0 0.0
    %968 = vmatpush1.msra.mxu0 0.0
    %969 = vmatprep.subr.mxu0 0.0
    %970 = vmatpush1.msra.mxu0 0.0
    %971 = vmatprep.subr.mxu0 0.0
    %972 = vmatpush1.msra.mxu0 0.0
    %973 = vmatprep.subr.mxu0 0.0
    %974 = vmatpush1.msra.mxu0 0.0
    %975 = vmatprep.subr.mxu0 0.0
    %976 = vmatpush1.msra.mxu0 0.0
    %977 = vmatprep.subr.mxu0 0.0
    %978 = vmatpush1.msra.mxu0 0.0
    %979 = vmatprep.subr.mxu0 0.0
    %980 = vmatpush1.msra.mxu0 0.0
    %981 = vmatprep.subr.mxu0 0.0
    %982 = vmatpush1.msra.mxu0 0.0
    %983 = vmatprep.subr.mxu0 0.0
    %984 = vmatpush1.msra.mxu0 0.0
    %985 = vmatprep.mubr.f32.mxu0 0.0
    %986 = vmatmul.mubr.f32.gmra.mrb[0].mxu0 %v907
    %v987 = vpop.f32.mrb[0].mxu0
    %v988 = vadd.f32 0.0, %v987
    %v989 = vpop.f32.mrb[0].mxu0
    %990 = vmatprep.mubr.f32.mxu0 0.0
    %991 = vmatmul.mubr.f32.gmra.mrb[0].mxu0 %v910
    %v992 = vpop.f32.mrb[0].mxu0
    %v993 = vadd.f32 0.0, %v992
    %v994 = vpop.f32.mrb[0].mxu0
    %995 = vmatprep.mubr.f32.mxu0 0.0
    %996 = vmatmul.mubr.f32.gmra.mrb[0].mxu0 %v913
    %v997 = vpop.f32.mrb[0].mxu0
    %v998 = vadd.f32 0.0, %v997
    %v999 = vpop.f32.mrb[0].mxu0
    %1000 = vmatprep.mubr.f32.mxu0 0.0
    %1001 = vmatmul.mubr.f32.gmra.mrb[0].mxu0 %v916
    %v1002 = vpop.f32.mrb[0].mxu0
    %v1003 = vadd.f32 0.0, %v1002
    %v1004 = vpop.f32.mrb[0].mxu0
    %1005 = vmatprep.mubr.f32.mxu0 0.0
    %1006 = vmatmul.mubr.f32.gmra.mrb[0].mxu0 %v919
    %v1007 = vpop.f32.mrb[0].mxu0
    %v1008 = vadd.f32 0.0, %v1007
    %v1009 = vpop.f32.mrb[0].mxu0
    %1010 = vdwg.mxu0
    %v1012 = vsel %vm29, %v886, 0
    %v1015 = vsel %vm29, %v887, 0
    %v1018 = vsel %vm29, %v888, 0
    %v1021 = vsel %vm29, %v889, 0
    %v1024 = vsel %vm29, %v890, 0
    %1026 = vmatprep.subr.mxu0 0.0
    %1027 = vmatpush1.msra.mxu0 %v892
    %1028 = vmatprep.subr.mxu0 0.0
    %1029 = vmatpush1.msra.mxu0 %v893
    %1030 = vmatprep.subr.mxu0 0.0
    %1031 = vmatpush1.msra.mxu0 %v894
    %1032 = vmatprep.subr.mxu0 0.0
    %1033 = vmatpush1.msra.mxu0 %v895
    %1034 = vmatprep.subr.mxu0 0.0
    %1035 = vmatpush1.msra.mxu0 0.0
    %1036 = vmatprep.subr.mxu0 0.0
    %1037 = vmatpush1.msra.mxu0 0.0
    %1038 = vmatprep.subr.mxu0 0.0
    %1039 = vmatpush1.msra.mxu0 0.0
    %1040 = vmatprep.subr.mxu0 0.0
    %1041 = vmatpush1.msra.mxu0 0.0
    %1042 = vmatprep.subr.mxu0 0.0
    %1043 = vmatpush1.msra.mxu0 0.0
    %1044 = vmatprep.subr.mxu0 0.0
    %1045 = vmatpush1.msra.mxu0 0.0
    %1046 = vmatprep.subr.mxu0 0.0
    %1047 = vmatpush1.msra.mxu0 0.0
    %1048 = vmatprep.subr.mxu0 0.0
    %1049 = vmatpush1.msra.mxu0 0.0
    %1050 = vmatprep.subr.mxu0 0.0
    %1051 = vmatpush1.msra.mxu0 0.0
    %1052 = vmatprep.subr.mxu0 0.0
    %1053 = vmatpush1.msra.mxu0 0.0
    %1054 = vmatprep.subr.mxu0 0.0
    %1055 = vmatpush1.msra.mxu0 0.0
    %1056 = vmatprep.subr.mxu0 0.0
    %1057 = vmatpush1.msra.mxu0 0.0
    %1058 = vmatprep.subr.mxu0 0.0
    %1059 = vmatpush1.msra.mxu0 0.0
    %1060 = vmatprep.subr.mxu0 0.0
    %1061 = vmatpush1.msra.mxu0 0.0
    %1062 = vmatprep.subr.mxu0 0.0
    %1063 = vmatpush1.msra.mxu0 0.0
    %1064 = vmatprep.subr.mxu0 0.0
    %1065 = vmatpush1.msra.mxu0 0.0
    %1066 = vmatprep.subr.mxu0 0.0
    %1067 = vmatpush1.msra.mxu0 0.0
    %1068 = vmatprep.subr.mxu0 0.0
    %1069 = vmatpush1.msra.mxu0 0.0
    %1070 = vmatprep.subr.mxu0 0.0
    %1071 = vmatpush1.msra.mxu0 0.0
    %1072 = vmatprep.subr.mxu0 0.0
    %1073 = vmatpush1.msra.mxu0 0.0
    %1074 = vmatprep.subr.mxu0 0.0
    %1075 = vmatpush1.msra.mxu0 0.0
    %1076 = vmatprep.subr.mxu0 0.0
    %1077 = vmatpush1.msra.mxu0 0.0
    %1078 = vmatprep.subr.mxu0 0.0
    %1079 = vmatpush1.msra.mxu0 0.0
    %1080 = vmatprep.subr.mxu0 0.0
    %1081 = vmatpush1.msra.mxu0 0.0
    %1082 = vmatprep.subr.mxu0 0.0
    %1083 = vmatpush1.msra.mxu0 0.0
    %1084 = vmatprep.subr.mxu0 0.0
    %1085 = vmatpush1.msra.mxu0 0.0
    %1086 = vmatprep.subr.mxu0 0.0
    %1087 = vmatpush1.msra.mxu0 0.0
    %1088 = vmatprep.subr.mxu0 0.0
    %1089 = vmatpush1.msra.mxu0 0.0
    %1090 = vmatprep.mubr.f32.mxu0 0.0
    %1091 = vmatmul.mubr.f32.gmra.mrb[0].mxu0 %v1012
    %v1092 = vpop.f32.mrb[0].mxu0
    %v1093 = vadd.f32 %v988, %v1092
    %v1094 = vpop.f32.mrb[0].mxu0
    %1095 = vmatprep.mubr.f32.mxu0 0.0
    %1096 = vmatmul.mubr.f32.gmra.mrb[0].mxu0 %v1015
    %v1097 = vpop.f32.mrb[0].mxu0
    %v1098 = vadd.f32 %v993, %v1097
    %v1099 = vpop.f32.mrb[0].mxu0
    %1100 = vmatprep.mubr.f32.mxu0 0.0
    %1101 = vmatmul.mubr.f32.gmra.mrb[0].mxu0 %v1018
    %v1102 = vpop.f32.mrb[0].mxu0
    %v1103 = vadd.f32 %v998, %v1102
    %v1104 = vpop.f32.mrb[0].mxu0
    %1105 = vmatprep.mubr.f32.mxu0 0.0
    %1106 = vmatmul.mubr.f32.gmra.mrb[0].mxu0 %v1021
    %v1107 = vpop.f32.mrb[0].mxu0
    %v1108 = vadd.f32 %v1003, %v1107
    %v1109 = vpop.f32.mrb[0].mxu0
    %1110 = vmatprep.mubr.f32.mxu0 0.0
    %1111 = vmatmul.mubr.f32.gmra.mrb[0].mxu0 %v1024
    %v1112 = vpop.f32.mrb[0].mxu0
    %v1113 = vadd.f32 %v1008, %v1112
    %v1114 = vpop.f32.mrb[0].mxu0
    %1115 = vdwg.mxu0
    %v1116 = vld [vmem:[#allocation2 + $0x2] sm:$0xff]
    %v1117 = vld [vmem:[#allocation2 + $0xa] sm:$0xff]
    %v1118 = vld [vmem:[#allocation2 + $0x12] sm:$0xff]
    %v1119 = vld [vmem:[#allocation2 + $0x1a] sm:$0xff]
    %v1120 = vld [vmem:[#allocation2 + $0x22] sm:$0x3]
    %s1121 = scalar_lea.vmem [#allocation3], 256
    %v1122 = vld [vmem:[%s1121] sm:$0xff]
    %v1123 = vld [vmem:[%s1121 + $0x8] sm:$0xff]
    %v1124 = vld [vmem:[%s1121 + $0x10] sm:$0xff]
    %v1125 = vld [vmem:[%s1121 + $0x18] sm:$0xff]
    %v1127 = vsel %vm29, %v1116, 0
    %v1130 = vsel %vm29, %v1117, 0
    %v1133 = vsel %vm29, %v1118, 0
    %v1136 = vsel %vm29, %v1119, 0
    %v1139 = vsel %vm29, %v1120, 0
    %1141 = vmatprep.subr.mxu0 0.0
    %1142 = vmatpush1.msra.mxu0 %v1122
    %1143 = vmatprep.subr.mxu0 0.0
    %1144 = vmatpush1.msra.mxu0 %v1123
    %1145 = vmatprep.subr.mxu0 0.0
    %1146 = vmatpush1.msra.mxu0 %v1124
    %1147 = vmatprep.subr.mxu0 0.0
    %1148 = vmatpush1.msra.mxu0 %v1125
    %1149 = vmatprep.subr.mxu0 0.0
    %1150 = vmatpush1.msra.mxu0 0.0
    %1151 = vmatprep.subr.mxu0 0.0
    %1152 = vmatpush1.msra.mxu0 0.0
    %1153 = vmatprep.subr.mxu0 0.0
    %1154 = vmatpush1.msra.mxu0 0.0
    %1155 = vmatprep.subr.mxu0 0.0
    %1156 = vmatpush1.msra.mxu0 0.0
    %1157 = vmatprep.subr.mxu0 0.0
    %1158 = vmatpush1.msra.mxu0 0.0
    %1159 = vmatprep.subr.mxu0 0.0
    %1160 = vmatpush1.msra.mxu0 0.0
    %1161 = vmatprep.subr.mxu0 0.0
    %1162 = vmatpush1.msra.mxu0 0.0
    %1163 = vmatprep.subr.mxu0 0.0
    %1164 = vmatpush1.msra.mxu0 0.0
    %1165 = vmatprep.subr.mxu0 0.0
    %1166 = vmatpush1.msra.mxu0 0.0
    %1167 = vmatprep.subr.mxu0 0.0
    %1168 = vmatpush1.msra.mxu0 0.0
    %1169 = vmatprep.subr.mxu0 0.0
    %1170 = vmatpush1.msra.mxu0 0.0
    %1171 = vmatprep.subr.mxu0 0.0
    %1172 = vmatpush1.msra.mxu0 0.0
    %1173 = vmatprep.subr.mxu0 0.0
    %1174 = vmatpush1.msra.mxu0 0.0
    %1175 = vmatprep.subr.mxu0 0.0
    %1176 = vmatpush1.msra.mxu0 0.0
    %1177 = vmatprep.subr.mxu0 0.0
    %1178 = vmatpush1.msra.mxu0 0.0
    %1179 = vmatprep.subr.mxu0 0.0
    %1180 = vmatpush1.msra.mxu0 0.0
    %1181 = vmatprep.subr.mxu0 0.0
    %1182 = vmatpush1.msra.mxu0 0.0
    %1183 = vmatprep.subr.mxu0 0.0
    %1184 = vmatpush1.msra.mxu0 0.0
    %1185 = vmatprep.subr.mxu0 0.0
    %1186 = vmatpush1.msra.mxu0 0.0
    %1187 = vmatprep.subr.mxu0 0.0
    %1188 = vmatpush1.msra.mxu0 0.0
    %1189 = vmatprep.subr.mxu0 0.0
    %1190 = vmatpush1.msra.mxu0 0.0
    %1191 = vmatprep.subr.mxu0 0.0
    %1192 = vmatpush1.msra.mxu0 0.0
    %1193 = vmatprep.subr.mxu0 0.0
    %1194 = vmatpush1.msra.mxu0 0.0
    %1195 = vmatprep.subr.mxu0 0.0
    %1196 = vmatpush1.msra.mxu0 0.0
    %1197 = vmatprep.subr.mxu0 0.0
    %1198 = vmatpush1.msra.mxu0 0.0
    %1199 = vmatprep.subr.mxu0 0.0
    %1200 = vmatpush1.msra.mxu0 0.0
    %1201 = vmatprep.subr.mxu0 0.0
    %1202 = vmatpush1.msra.mxu0 0.0
    %1203 = vmatprep.subr.mxu0 0.0
    %1204 = vmatpush1.msra.mxu0 0.0
    %1205 = vmatprep.mubr.f32.mxu0 0.0
    %1206 = vmatmul.mubr.f32.gmra.mrb[0].mxu0 %v1127
    %v1207 = vpop.f32.mrb[0].mxu0
    %v1208 = vadd.f32 0.0, %v1207
    %v1209 = vpop.f32.mrb[0].mxu0
    %1210 = vmatprep.mubr.f32.mxu0 0.0
    %1211 = vmatmul.mubr.f32.gmra.mrb[0].mxu0 %v1130
    %v1212 = vpop.f32.mrb[0].mxu0
    %v1213 = vadd.f32 0.0, %v1212
    %v1214 = vpop.f32.mrb[0].mxu0
    %1215 = vmatprep.mubr.f32.mxu0 0.0
    %1216 = vmatmul.mubr.f32.gmra.mrb[0].mxu0 %v1133
    %v1217 = vpop.f32.mrb[0].mxu0
    %v1218 = vadd.f32 0.0, %v1217
    %v1219 = vpop.f32.mrb[0].mxu0
    %1220 = vmatprep.mubr.f32.mxu0 0.0
    %1221 = vmatmul.mubr.f32.gmra.mrb[0].mxu0 %v1136
    %v1222 = vpop.f32.mrb[0].mxu0
    %v1223 = vadd.f32 0.0, %v1222
    %v1224 = vpop.f32.mrb[0].mxu0
    %1225 = vmatprep.mubr.f32.mxu0 0.0
    %1226 = vmatmul.mubr.f32.gmra.mrb[0].mxu0 %v1139
    %v1227 = vpop.f32.mrb[0].mxu0
    %v1228 = vadd.f32 0.0, %v1227
    %v1229 = vpop.f32.mrb[0].mxu0
    %1230 = vdwg.mxu0
    %v1231 = vadd.f32 %v1093, %v1208
    %v1232 = vadd.f32 %v1098, %v1213
    %v1233 = vadd.f32 %v1103, %v1218
    %v1234 = vadd.f32 %v1108, %v1223
    %v1235 = vadd.f32 %v1113, %v1228
    %s1236 = scalar_lea.vmem %s2, 2
    %v1237 = vld [vmem:[%s1236] sm:$0x1]
    %v1239 = vlaneseq
    %v1240 = vshrl.u32 %v1239, 7
    %v1241 = vsub.s32 0, %v1240
    %v1242 = vrot.slane %v1237, %v1241
    %v1244 = vadd.f32 %v1231, %v1242
    %v1245 = vadd.f32 %v1232, %v1242
    %vm1246 = vcmp.gt.f32.partialorder %v1244, 0.0
    %vm1247 = vcmp.gt.f32.partialorder %v1245, 0.0
    %v1248 = vmin.f32 %v1244, 0.0
    %v1249 = vmin.f32 %v1245, 0.0
    %v1250 = vmul.f32 %v1248, 1.442695
    %v1251 = vpow.pop %v1250
    %v1252 = vmul.f32 %v1249, 1.442695
    %v1253 = vpow.pop %v1252
    %v1254 = vsub.f32 %v1251, 1.0
    %v1255 = vsub.f32 %v1253, 1.0
    %v1256 = vsel %vm1246, %v1244, %v1254
    %v1257 = vsel %vm1247, %v1245, %v1255
    %1258 = vst [vmem:[#allocation6] sm:$0xff] %v1256
    %1259 = vst [vmem:[#allocation6 + $0x8] sm:$0xff] %v1257
    %v1260 = vadd.f32 %v1233, %v1242
    %v1261 = vadd.f32 %v1234, %v1242
    %v1262 = vadd.f32 %v1235, %v1242
    %vm1263 = vcmp.gt.f32.partialorder %v1260, 0.0
    %vm1264 = vcmp.gt.f32.partialorder %v1261, 0.0
    %vm1265 = vcmp.gt.f32.partialorder %v1262, 0.0
    %v1266 = vmin.f32 %v1260, 0.0
    %v1267 = vmin.f32 %v1261, 0.0
    %v1268 = vmin.f32 %v1262, 0.0
    %v1269 = vmul.f32 %v1266, 1.442695
    %v1270 = vpow.pop %v1269
    %v1271 = vmul.f32 %v1267, 1.442695
    %v1272 = vpow.pop %v1271
    %v1273 = vmul.f32 %v1268, 1.442695
    %v1274 = vpow.pop %v1273
    %v1275 = vsub.f32 %v1270, 1.0
    %v1276 = vsub.f32 %v1272, 1.0
    %v1277 = vsub.f32 %v1274, 1.0
    %v1278 = vsel %vm1263, %v1260, %v1275
    %v1279 = vsel %vm1264, %v1261, %v1276
    %v1280 = vsel %vm1265, %v1262, %v1277
    %1281 = vst [vmem:[#allocation6 + $0xe] sm:$0xfc] %v1278
    %1282 = vst [vmem:[#allocation6 + $0x16] sm:$0xff] %v1279
    %1283 = vst [vmem:[#allocation6 + $0x1e] sm:$0x3] %v1280
    // Predicated region
    $region18: #{tpu_custom_call.1} parent=1 // pred_check
      _
    $region19: #{tpu_custom_call.1} parent=1 // pred_check_branch
      %1285 = sbr.rel (0) target = $region21
    $region20: #{tpu_custom_call.1} parent=1 // pred_region
      %s1287 = ssub.s32 512, 512
      %1288 = vsyncadd [#allocation5], %s1287
      %s1289 = sshll.u32 [#allocation6], 4
      %s1290 = int_to_ptr.vmem [resolvable:$true] %s1289
      %1295 = dma.vmem_to_hbm [thread:$0]  %s1290, 512, %s3, [#allocation5], 128, 128, 8
    $region21: #{tpu_custom_call.1} parent=1 // pred_fallthru
      _
    // Predicated region
    $region22: #{tpu_custom_call.1} parent=1 // pred_check
      _
    $region23: #{tpu_custom_call.1} parent=1 // pred_check_branch
      %1297 = sbr.rel (0) target = $region25
    $region24: #{tpu_custom_call.1} parent=1 // pred_region
      %1298 = dma.done [#allocation5], 512
    $region25: #{tpu_custom_call.1} parent=1 // pred_fallthru
      _
    %1299 = vsyncpa [#allocation4], 1
    %1300 = vsyncpa [#allocation5], 1

</llo_original>
